<compile_context>
chip_gen: v7x
topology: tpu7x:2x2x1
jax: 0.10.0
libtpu: 0.0.40
codegen_flags: <defaults>
</compile_context>

<pallas_src>
import jax
import jax.numpy as jnp
import numpy as np
from jax import lax
from jax.experimental import pallas as pl
from jax.experimental.pallas import tpu as pltpu


def _ceil_to(x, m):
    return ((x + m - 1) // m) * m


def _supcon_kernel(featl_ref, featr_ref, lab_ref, labext_ref,
                   keep_ref, valid_ref, out_ref,
                   m_sc, l_sc, sp_sc, cp_sc):
    # featl_ref:  [TN, D] bf16  row tile of proposals, ALREADY scaled by 1/T
    # featr_ref:  [TM, D] bf16  column tile of [proposals | queue] (unscaled)
    # lab_ref:    [TN, 1] i32   proposal labels (row tile)
    # labext_ref: [1, TM] i32   labels of the columns
    # keep_ref:   [TN, 1] f32   1.0 where ious >= iou_threshold
    # valid_ref:  [1, TM] f32   1.0 where column is a kept proposal / fg queue
    # out_ref:    [TN, 1] f32   per-row loss (0 for non-kept / padded rows)
    # scratch (per row tile, persists across the column grid axis):
    #   m_sc  running max over valid columns (incl. self, matching sim_row_max)
    #   l_sc  running softmax denominator sum exp(sim - m) over non-self valid
    #   sp_sc running sum of sim over positive (same-label, valid, non-self)
    #   cp_sc running count of positive columns
    j = pl.program_id(1)
    nj = pl.num_programs(1)

    @pl.when(j == 0)
    def _init():
        m_sc[...] = jnp.full_like(m_sc, -1e30)
        l_sc[...] = jnp.zeros_like(l_sc)
        sp_sc[...] = jnp.zeros_like(sp_sc)
        cp_sc[...] = jnp.zeros_like(cp_sc)

    lhs = featl_ref[...]                                  # [TN, D] bf16 (pre-scaled)
    rhs = featr_ref[...]                                  # [TM, D] bf16

    # MXU: contract over the shared last (lane) dim of both operands — the
    # same NT pattern as the stock flash-attention kernel; no transpose.
    sim = lax.dot_general(lhs, rhs,
                          dimension_numbers=(((1,), (1,)), ((), ())),
                          preferred_element_type=jnp.float32)   # [TN, TM] f32

    tn, tm = sim.shape
    valid = valid_ref[...] > 0.0                          # [1, TM] bool

    # Self-pair (compacted-matrix diagonal) exclusion via broadcast compare of
    # a (TN,1) row-index column against a (1,TM) column-index row.
    row_g = pl.program_id(0) * tn + lax.broadcasted_iota(jnp.int32, (tn, 1), 0)
    col_g = j * tm + lax.broadcasted_iota(jnp.int32, (1, tm), 1)
    not_self = row_g != col_g                             # [TN, TM] bool

    neg = jnp.float32(-1e30)
    sim_v = jnp.where(valid, sim, neg)                    # invalid cols -> -1e30

    # Online softmax: row max over ALL valid columns (incl. self), as in the
    # reference's sim_row_max.
    tile_max = jnp.max(sim_v, axis=1, keepdims=True)      # [TN, 1]
    m_prev = m_sc[...]
    m_new = jnp.maximum(m_prev, tile_max)
    alpha = jnp.exp(m_prev - m_new)

    # exp(-1e30 - m) underflows to exactly 0, so invalid columns vanish from
    # the denominator without an extra mask pass; only self needs zeroing.
    # (If a leading tile has no valid column at all, the alpha rescale wipes
    # any spurious contribution as soon as a valid column appears; rows with
    # no valid columns anywhere are keep==0 and masked at the end.)
    p = jnp.where(not_self, jnp.exp(sim_v - m_new), 0.0)
    l_sc[...] = alpha * l_sc[...] + jnp.sum(p, axis=1, keepdims=True)
    m_sc[...] = m_new

    match = lab_ref[...] == labext_ref[...]               # [TN, TM] bool
    pos = jnp.logical_and(jnp.logical_and(match, valid), not_self)
    sp_sc[...] += jnp.sum(jnp.where(pos, sim, 0.0), axis=1, keepdims=True)
    cp_sc[...] += jnp.sum(pos.astype(jnp.float32), axis=1, keepdims=True)

    @pl.when(j == nj - 1)
    def _finalize():
        keep = keep_ref[...]                              # [TN, 1]
        # numerator: sum_p (sim_p - (m + log l)); denominator: |label_mask|
        log_denom = m_sc[...] + jnp.log(jnp.maximum(l_sc[...], 1e-30))
        num = sp_sc[...] - cp_sc[...] * log_denom
        # Self column is same-label & valid for every kept row -> den = cp + 1
        # (non-kept rows are masked out below anyway).  Exact divide on the
        # exact integer count (review: no approx reciprocal here).
        den = cp_sc[...] + 1.0
        per_row = -(num / den)
        out_ref[...] = jnp.where(keep > 0.0, per_row, 0.0)


def supcon_loss_with_storage(features, labels, ious, queue, queue_label,
                             temperature=0.2, iou_threshold=0.5,
                             row_tile=128, col_tile=512):
    """JAX/Pallas equivalent of SupConLossWithStorage.forward.

    The dynamic boolean compaction of the PyTorch code (ious >= thr,
    queue_label != -1) is re-expressed with static-shape validity masks so the
    kernel keeps static shapes; the math reproduces the compacted computation.
    """
    features = jnp.asarray(features, jnp.float32)
    queue = jnp.asarray(queue, jnp.float32)
    n, d = features.shape
    q = queue.shape[0]
    inv_temp = float(1.0 / temperature)

    keep = (jnp.reshape(ious, (-1,)) >= iou_threshold).astype(jnp.float32)   # [n]
    fg = (jnp.reshape(queue_label, (-1,)) != -1).astype(jnp.float32)         # [q]
    labels_i = jnp.reshape(labels, (-1,)).astype(jnp.int32)
    qlab_i = jnp.reshape(queue_label, (-1,)).astype(jnp.int32)

    # ---------------- tile selection ----------------
    # Large row tiles cut HBM re-streaming of feat_ext (bytes scale with
    # n_pad/row_tile * m_pad * D) and fill the MXU, but keep >= 2 row blocks
    # when possible so v7x's two TensorCores both get work on the "parallel"
    # axis.  (For very large N, row_tile=256 is also a good choice.)
    row_tile = max(8, min(row_tile, _ceil_to(n, 8)))
    while row_tile > 64 and _ceil_to(n, row_tile) // row_tile < 2:
        row_tile //= 2
    row_tile = max(8, (row_tile // 8) * 8)
    n_pad = _ceil_to(n, row_tile)

    m = n_pad + q
    col_tile = max(128, min(col_tile, _ceil_to(m, 128)))
    m_pad = _ceil_to(m, col_tile)

    # ---------------- operand construction ----------------
    feats_p = jnp.pad(features, ((0, n_pad - n), (0, 0)))
    keep_p = jnp.pad(keep, (0, n_pad - n))
    labels_p = jnp.pad(labels_i, (0, n_pad - n), constant_values=-2)

    # LHS rows: temperature folded in BEFORE the bf16 cast (single rounding).
    # This fully hoists the per-step scale out of the kernel; HBM traffic for
    # the row tiles is unchanged (they were streamed once per row block anyway).
    feat_lhs = (feats_p * inv_temp).astype(jnp.bfloat16)          # [n_pad, D]

    # Columns: [padded proposals | queue | padding]; padded cols have valid=0.
    feat_ext = jnp.concatenate([feats_p, queue], axis=0)
    feat_ext = jnp.pad(feat_ext, ((0, m_pad - m), (0, 0))).astype(jnp.bfloat16)

    valid_row = jnp.concatenate(
        [keep_p, fg, jnp.zeros((m_pad - m,), jnp.float32)]).reshape(1, m_pad)
    label_row = jnp.concatenate(
        [labels_p, qlab_i, jnp.full((m_pad - m,), -2, jnp.int32)]).reshape(1, m_pad)
    labels_col = labels_p.reshape(n_pad, 1)
    keep_col = keep_p.reshape(n_pad, 1)

    grid = (n_pad // row_tile, m_pad // col_tile)

    per_row = pl.pallas_call(
        _supcon_kernel,
        out_shape=jax.ShapeDtypeStruct((n_pad, 1), jnp.float32),
        grid_spec=pltpu.PrefetchScalarGridSpec(
            num_scalar_prefetch=0,
            grid=grid,
            in_specs=[
                pl.BlockSpec((row_tile, d), lambda i, j: (i, 0)),   # scaled LHS rows
                pl.BlockSpec((col_tile, d), lambda i, j: (j, 0)),   # RHS column tile
                pl.BlockSpec((row_tile, 1), lambda i, j: (i, 0)),   # labels (rows)
                pl.BlockSpec((1, col_tile), lambda i, j: (0, j)),   # labels (cols)
                pl.BlockSpec((row_tile, 1), lambda i, j: (i, 0)),   # keep mask
                pl.BlockSpec((1, col_tile), lambda i, j: (0, j)),   # valid mask
            ],
            out_specs=pl.BlockSpec((row_tile, 1), lambda i, j: (i, 0)),
            scratch_shapes=[pltpu.VMEM((row_tile, 1), jnp.float32)] * 4,
        ),
        compiler_params=pltpu.CompilerParams(
            dimension_semantics=("parallel", "arbitrary"),
            # Headroom for enlarged tiles + double-buffered RHS; well under
            # v7x's 64 MiB physical VMEM and v5e/v6e's 128 MiB.
            vmem_limit_bytes=32 * 1024 * 1024),
    )(feat_lhs, feat_ext, labels_col, label_row, keep_col, valid_row)

    total = jnp.sum(per_row)
    count = jnp.sum(keep)
    # TODO(synk): PyTorch returns NaN when no proposal passes the IoU threshold
    # (or a kept row has no valid non-self column); we guard and return 0 instead.
    return jnp.where(count > 0, total / jnp.maximum(count, 1.0), 0.0)


def _numpy_reference(features, labels, ious, queue, queue_label,
                     temperature=0.2, iou_threshold=0.5):
    f = np.asarray(features, np.float32)
    lab = np.asarray(labels).reshape(-1)
    io = np.asarray(ious).reshape(-1)
    qu = np.asarray(queue, np.float32)
    ql = np.asarray(queue_label).reshape(-1)

    fgm = ql != -1
    qu_f, ql_f = qu[fgm], ql[fgm]
    kp = io >= iou_threshold
    fk, lk = f[kp], lab[kp].reshape(-1, 1)
    fe = np.concatenate([fk, qu_f], axis=0)
    le = np.concatenate([lk, ql_f.reshape(-1, 1)], axis=0)
    lm = (lk == le.T).astype(np.float32)
    sim = (fk @ fe.T) / temperature
    sim = sim - sim.max(axis=1, keepdims=True)
    logits_mask = np.ones_like(sim)
    np.fill_diagonal(logits_mask, 0.0)
    exp_sim = np.exp(sim) * logits_mask
    log_prob = sim - np.log(exp_sim.sum(axis=1, keepdims=True))
    per = (log_prob * logits_mask * lm).sum(1) / lm.sum(1)
    return float((-per).mean())


if __name__ == "__main__":
    N, Q, D, C = 128, 384, 128, 8
    key = jax.random.PRNGKey(0)
    k1, k2, k3, k4, k5 = jax.random.split(key, 5)

    features = jax.random.normal(k1, (N, D), jnp.float32)
    features = features / jnp.linalg.norm(features, axis=1, keepdims=True)
    labels = jax.random.randint(k2, (N,), 0, C, jnp.int32)
    ious = jax.random.uniform(k3, (N,), jnp.float32)
    ious = ious.at[0].set(0.9).at[1].set(0.7)             # guarantee kept proposals
    queue = jax.random.normal(k4, (Q, D), jnp.float32)
    queue = queue / jnp.linalg.norm(queue, axis=1, keepdims=True)
    queue_label = jax.random.randint(k5, (Q,), 0, C, jnp.int32)
    queue_label = queue_label.at[3].set(-1).at[7].set(-1).at[100].set(-1)

    loss = supcon_loss_with_storage(features, labels, ious, queue, queue_label)
    loss = jax.block_until_ready(loss)

    ref = _numpy_reference(features, labels, ious, queue, queue_label)
    assert np.isfinite(float(loss))
    # bf16 MXU inputs => slightly looser tolerance than f32.
    assert np.allclose(float(loss), ref, rtol=1e-2, atol=1e-2), (float(loss), ref)
    print("KERNEL_OK")
</pallas_src>

<mosaic_0001>
module attributes {stable_mosaic.version = 11 : i64} {
  func.func @_supcon_kernel(%arg0: i32, %arg1: i32, %arg2: memref<64x128xbf16, #tpu.memory_space<vmem>>, %arg3: memref<512x128xbf16, #tpu.memory_space<vmem>>, %arg4: memref<64x1xi32, #tpu.memory_space<vmem>>, %arg5: memref<1x512xi32, #tpu.memory_space<vmem>>, %arg6: memref<64x1xf32, #tpu.memory_space<vmem>>, %arg7: memref<1x512xf32, #tpu.memory_space<vmem>>, %arg8: memref<64x1xf32, #tpu.memory_space<vmem>>, %arg9: memref<64x1xf32, #tpu.memory_space<vmem>>, %arg10: memref<64x1xf32, #tpu.memory_space<vmem>>, %arg11: memref<64x1xf32, #tpu.memory_space<vmem>>, %arg12: memref<64x1xf32, #tpu.memory_space<vmem>>) attributes {dimension_semantics = [#tpu.dimension_semantics<parallel>, #tpu.dimension_semantics<arbitrary>], iteration_bounds = array<i64: 2, 1>, scalar_prefetch = 0 : i64, scratch_operands = 4 : i64, tpu.core_type = #tpu.core_type<tc>, window_params = [{transform_indices = @transform_0, window_bounds = array<i64: 64, 128>}, {transform_indices = @transform_1, window_bounds = array<i64: 512, 128>}, {transform_indices = @transform_2, window_bounds = array<i64: 64, 1>}, {transform_indices = @transform_3, window_bounds = array<i64: 1, 512>}, {transform_indices = @transform_4, window_bounds = array<i64: 64, 1>}, {transform_indices = @transform_5, window_bounds = array<i64: 1, 512>}, {transform_indices = @transform_6, window_bounds = array<i64: 64, 1>}]} {
    %c0_i32 = arith.constant 0 : i32
    %0 = arith.cmpi eq, %arg1, %c0_i32 : i32
    %1 = arith.extui %0 : i1 to i32
    %c0_i32_0 = arith.constant 0 : i32
    %2 = arith.cmpi ne, %1, %c0_i32_0 : i32
    scf.if %2 {
      %cst_36 = arith.constant -1.000000e+30 : f32
      %67 = vector.broadcast %cst_36 : f32 to vector<64x1xf32>
      %c0_37 = arith.constant 0 : index
      %c0_38 = arith.constant 0 : index
      %68 = vector.load %arg9[%c0_37, %c0_38] : memref<64x1xf32, #tpu.memory_space<vmem>>, vector<64x1xf32>
      tpu.vector_store %arg9[%c0_37, %c0_38], %67 {strides = array<i32>} : memref<64x1xf32, #tpu.memory_space<vmem>>, vector<64x1xf32>,
      %cst_39 = arith.constant 0.000000e+00 : f32
      %69 = vector.broadcast %cst_39 : f32 to vector<64x1xf32>
      %c0_40 = arith.constant 0 : index
      %c0_41 = arith.constant 0 : index
      %70 = vector.load %arg10[%c0_40, %c0_41] : memref<64x1xf32, #tpu.memory_space<vmem>>, vector<64x1xf32>
      tpu.vector_store %arg10[%c0_40, %c0_41], %69 {strides = array<i32>} : memref<64x1xf32, #tpu.memory_space<vmem>>, vector<64x1xf32>,
      %cst_42 = arith.constant 0.000000e+00 : f32
      %71 = vector.broadcast %cst_42 : f32 to vector<64x1xf32>
      %c0_43 = arith.constant 0 : index
      %c0_44 = arith.constant 0 : index
      %72 = vector.load %arg11[%c0_43, %c0_44] : memref<64x1xf32, #tpu.memory_space<vmem>>, vector<64x1xf32>
      tpu.vector_store %arg11[%c0_43, %c0_44], %71 {strides = array<i32>} : memref<64x1xf32, #tpu.memory_space<vmem>>, vector<64x1xf32>,
      %cst_45 = arith.constant 0.000000e+00 : f32
      %73 = vector.broadcast %cst_45 : f32 to vector<64x1xf32>
      %c0_46 = arith.constant 0 : index
      %c0_47 = arith.constant 0 : index
      %74 = vector.load %arg12[%c0_46, %c0_47] : memref<64x1xf32, #tpu.memory_space<vmem>>, vector<64x1xf32>
      tpu.vector_store %arg12[%c0_46, %c0_47], %73 {strides = array<i32>} : memref<64x1xf32, #tpu.memory_space<vmem>>, vector<64x1xf32>,
    } else {
    }
    %c0 = arith.constant 0 : index
    %c0_1 = arith.constant 0 : index
    %3 = vector.load %arg2[%c0, %c0_1] : memref<64x128xbf16, #tpu.memory_space<vmem>>, vector<64x128xbf16>
    %c0_2 = arith.constant 0 : index
    %c0_3 = arith.constant 0 : index
    %4 = vector.load %arg3[%c0_2, %c0_3] : memref<512x128xbf16, #tpu.memory_space<vmem>>, vector<512x128xbf16>
    %cst = arith.constant dense<0.000000e+00> : vector<64x512xf32>
    %5 = tpu.matmul %3, %4, %cst {dimension_numbers = #tpu.dot_dimension_numbers<[1], [1], [0], [0], [0, 0, 1, 0], [], []>} : vector<64x128xbf16>, vector<512x128xbf16>, vector<64x512xf32> -> vector<64x512xf32>
    %c0_4 = arith.constant 0 : index
    %c0_5 = arith.constant 0 : index
    %6 = vector.load %arg7[%c0_4, %c0_5] : memref<1x512xf32, #tpu.memory_space<vmem>>, vector<1x512xf32>
    %cst_6 = arith.constant 0.000000e+00 : f32
    %7 = vector.broadcast %cst_6 : f32 to vector<1x512xf32>
    %8 = arith.cmpf ogt, %6, %7 : vector<1x512xf32>
    %c64_i32 = arith.constant 64 : i32
    %9 = arith.muli %arg0, %c64_i32 : i32
    %10 = tpu.iota {dimensions = array<i32: 0>} : vector<64x1xi32>
    %11 = vector.broadcast %9 : i32 to vector<64x1xi32>
    %12 = arith.addi %11, %10 : vector<64x1xi32>
    %c512_i32 = arith.constant 512 : i32
    %13 = arith.muli %arg1, %c512_i32 : i32
    %14 = tpu.iota {dimensions = array<i32: 1>} : vector<1x512xi32>
    %15 = vector.broadcast %13 : i32 to vector<1x512xi32>
    %16 = arith.addi %15, %14 : vector<1x512xi32>
    %17 = vector.broadcast %12 : vector<64x1xi32> to vector<64x512xi32>
    %18 = vector.broadcast %16 : vector<1x512xi32> to vector<64x512xi32>
    %19 = arith.cmpi ne, %17, %18 : vector<64x512xi32>
    %cst_7 = arith.constant -1.000000e+30 : f32
    %20 = vector.shape_cast %8 : vector<1x512xi1> to vector<1x512xi1>
    %21 = vector.broadcast %20 : vector<1x512xi1> to vector<64x512xi1>
    %22 = vector.broadcast %cst_7 : f32 to vector<64x512xf32>
    %23 = arith.select %21, %5, %22 : vector<64x512xi1>, vector<64x512xf32>
    %cst_8 = arith.constant dense<0xFF800000> : vector<64xf32>
    %24 = vector.multi_reduction <maximumf>, %23, %cst_8 [1] : vector<64x512xf32> to vector<64xf32>
    %25 = vector.shape_cast %24 : vector<64xf32> to vector<64x1xf32>
    %c0_9 = arith.constant 0 : index
    %c0_10 = arith.constant 0 : index
    %26 = vector.load %arg9[%c0_9, %c0_10] : memref<64x1xf32, #tpu.memory_space<vmem>>, vector<64x1xf32>
    %27 = arith.maximumf %26, %25 : vector<64x1xf32>
    %28 = arith.subf %26, %27 : vector<64x1xf32>
    %29 = math.exp %28 : vector<64x1xf32>
    %30 = vector.broadcast %27 : vector<64x1xf32> to vector<64x512xf32>
    %31 = arith.subf %23, %30 : vector<64x512xf32>
    %32 = math.exp %31 : vector<64x512xf32>
    %cst_11 = arith.constant 0.000000e+00 : f32
    %33 = vector.broadcast %cst_11 : f32 to vector<64x512xf32>
    %34 = arith.select %19, %32, %33 : vector<64x512xi1>, vector<64x512xf32>
    %c0_12 = arith.constant 0 : index
    %c0_13 = arith.constant 0 : index
    %35 = vector.load %arg10[%c0_12, %c0_13] : memref<64x1xf32, #tpu.memory_space<vmem>>, vector<64x1xf32>
    %36 = arith.mulf %29, %35 : vector<64x1xf32>
    %cst_14 = arith.constant dense<0.000000e+00> : vector<64xf32>
    %37 = vector.multi_reduction <add>, %34, %cst_14 [1] : vector<64x512xf32> to vector<64xf32>
    %38 = vector.shape_cast %37 : vector<64xf32> to vector<64x1xf32>
    %39 = arith.addf %36, %38 : vector<64x1xf32>
    %c0_15 = arith.constant 0 : index
    %c0_16 = arith.constant 0 : index
    %40 = vector.load %arg10[%c0_15, %c0_16] : memref<64x1xf32, #tpu.memory_space<vmem>>, vector<64x1xf32>
    tpu.vector_store %arg10[%c0_15, %c0_16], %39 {strides = array<i32>} : memref<64x1xf32, #tpu.memory_space<vmem>>, vector<64x1xf32>,
    %c0_17 = arith.constant 0 : index
    %c0_18 = arith.constant 0 : index
    %41 = vector.load %arg9[%c0_17, %c0_18] : memref<64x1xf32, #tpu.memory_space<vmem>>, vector<64x1xf32>
    tpu.vector_store %arg9[%c0_17, %c0_18], %27 {strides = array<i32>} : memref<64x1xf32, #tpu.memory_space<vmem>>, vector<64x1xf32>,
    %c0_19 = arith.constant 0 : index
    %c0_20 = arith.constant 0 : index
    %42 = vector.load %arg4[%c0_19, %c0_20] : memref<64x1xi32, #tpu.memory_space<vmem>>, vector<64x1xi32>
    %c0_21 = arith.constant 0 : index
    %c0_22 = arith.constant 0 : index
    %43 = vector.load %arg5[%c0_21, %c0_22] : memref<1x512xi32, #tpu.memory_space<vmem>>, vector<1x512xi32>
    %44 = vector.broadcast %42 : vector<64x1xi32> to vector<64x512xi32>
    %45 = vector.broadcast %43 : vector<1x512xi32> to vector<64x512xi32>
    %46 = arith.cmpi eq, %44, %45 : vector<64x512xi32>
    %47 = vector.broadcast %8 : vector<1x512xi1> to vector<64x512xi1>
    %48 = arith.andi %46, %47 : vector<64x512xi1>
    %49 = arith.andi %48, %19 : vector<64x512xi1>
    %c0_23 = arith.constant 0 : index
    %c0_24 = arith.constant 0 : index
    %50 = vector.load %arg11[%c0_23, %c0_24] : memref<64x1xf32, #tpu.memory_space<vmem>>, vector<64x1xf32>
    %cst_25 = arith.constant 0.000000e+00 : f32
    %51 = vector.broadcast %cst_25 : f32 to vector<64x512xf32>
    %52 = arith.select %49, %5, %51 : vector<64x512xi1>, vector<64x512xf32>
    %cst_26 = arith.constant dense<0.000000e+00> : vector<64xf32>
    %53 = vector.multi_reduction <add>, %52, %cst_26 [1] : vector<64x512xf32> to vector<64xf32>
    %54 = vector.shape_cast %53 : vector<64xf32> to vector<64x1xf32>
    %55 = arith.addf %50, %54 : vector<64x1xf32>
    %c0_27 = arith.constant 0 : index
    %c0_28 = arith.constant 0 : index
    %56 = vector.load %arg11[%c0_27, %c0_28] : memref<64x1xf32, #tpu.memory_space<vmem>>, vector<64x1xf32>
    tpu.vector_store %arg11[%c0_27, %c0_28], %55 {strides = array<i32>} : memref<64x1xf32, #tpu.memory_space<vmem>>, vector<64x1xf32>,
    %c0_29 = arith.constant 0 : index
    %c0_30 = arith.constant 0 : index
    %57 = vector.load %arg12[%c0_29, %c0_30] : memref<64x1xf32, #tpu.memory_space<vmem>>, vector<64x1xf32>
    %58 = arith.extui %49 : vector<64x512xi1> to vector<64x512xi32>
    %59 = arith.sitofp %58 : vector<64x512xi32> to vector<64x512xf32>
    %cst_31 = arith.constant dense<0.000000e+00> : vector<64xf32>
    %60 = vector.multi_reduction <add>, %59, %cst_31 [1] : vector<64x512xf32> to vector<64xf32>
    %61 = vector.shape_cast %60 : vector<64xf32> to vector<64x1xf32>
    %62 = arith.addf %57, %61 : vector<64x1xf32>
    %c0_32 = arith.constant 0 : index
    %c0_33 = arith.constant 0 : index
    %63 = vector.load %arg12[%c0_32, %c0_33] : memref<64x1xf32, #tpu.memory_space<vmem>>, vector<64x1xf32>
    tpu.vector_store %arg12[%c0_32, %c0_33], %62 {strides = array<i32>} : memref<64x1xf32, #tpu.memory_space<vmem>>, vector<64x1xf32>,
    %c0_i32_34 = arith.constant 0 : i32
    %64 = arith.cmpi eq, %arg1, %c0_i32_34 : i32
    %65 = arith.extui %64 : i1 to i32
    %c0_i32_35 = arith.constant 0 : i32
    %66 = arith.cmpi ne, %65, %c0_i32_35 : i32
    scf.if %66 {
      %c0_36 = arith.constant 0 : index
      %c0_37 = arith.constant 0 : index
      %67 = vector.load %arg6[%c0_36, %c0_37] : memref<64x1xf32, #tpu.memory_space<vmem>>, vector<64x1xf32>
      %c0_38 = arith.constant 0 : index
      %c0_39 = arith.constant 0 : index
      %68 = vector.load %arg9[%c0_38, %c0_39] : memref<64x1xf32, #tpu.memory_space<vmem>>, vector<64x1xf32>
      %c0_40 = arith.constant 0 : index
      %c0_41 = arith.constant 0 : index
      %69 = vector.load %arg10[%c0_40, %c0_41] : memref<64x1xf32, #tpu.memory_space<vmem>>, vector<64x1xf32>
      %cst_42 = arith.constant 1.000000e-30 : f32
      %70 = vector.broadcast %cst_42 : f32 to vector<64x1xf32>
      %71 = arith.maximumf %69, %70 : vector<64x1xf32>
      %72 = math.log %71 : vector<64x1xf32>
      %73 = arith.addf %68, %72 : vector<64x1xf32>
      %c0_43 = arith.constant 0 : index
      %c0_44 = arith.constant 0 : index
      %74 = vector.load %arg11[%c0_43, %c0_44] : memref<64x1xf32, #tpu.memory_space<vmem>>, vector<64x1xf32>
      %c0_45 = arith.constant 0 : index
      %c0_46 = arith.constant 0 : index
      %75 = vector.load %arg12[%c0_45, %c0_46] : memref<64x1xf32, #tpu.memory_space<vmem>>, vector<64x1xf32>
      %76 = arith.mulf %75, %73 : vector<64x1xf32>
      %77 = arith.subf %74, %76 : vector<64x1xf32>
      %c0_47 = arith.constant 0 : index
      %c0_48 = arith.constant 0 : index
      %78 = vector.load %arg12[%c0_47, %c0_48] : memref<64x1xf32, #tpu.memory_space<vmem>>, vector<64x1xf32>
      %cst_49 = arith.constant 1.000000e+00 : f32
      %79 = vector.broadcast %cst_49 : f32 to vector<64x1xf32>
      %80 = arith.addf %78, %79 : vector<64x1xf32>
      %81 = arith.divf %77, %80 : vector<64x1xf32>
      %cst_50 = arith.constant 0.000000e+00 : f32
      %82 = vector.broadcast %cst_50 : f32 to vector<64x1xf32>
      %83 = arith.subf %82, %81 : vector<64x1xf32>
      %cst_51 = arith.constant 0.000000e+00 : f32
      %84 = vector.broadcast %cst_51 : f32 to vector<64x1xf32>
      %85 = arith.cmpf ogt, %67, %84 : vector<64x1xf32>
      %cst_52 = arith.constant 0.000000e+00 : f32
      %86 = vector.broadcast %cst_52 : f32 to vector<64x1xf32>
      %87 = arith.select %85, %83, %86 : vector<64x1xi1>, vector<64x1xf32>
      %c0_53 = arith.constant 0 : index
      %c0_54 = arith.constant 0 : index
      %88 = vector.load %arg8[%c0_53, %c0_54] : memref<64x1xf32, #tpu.memory_space<vmem>>, vector<64x1xf32>
      tpu.vector_store %arg8[%c0_53, %c0_54], %87 {strides = array<i32>} : memref<64x1xf32, #tpu.memory_space<vmem>>, vector<64x1xf32>,
    } else {
    }
    return
  }
  func.func @transform_0(%arg0: i32, %arg1: i32) -> (i32, i32) {
    %c0_i32 = arith.constant 0 : i32
    %c0_i32_0 = arith.constant 0 : i32
    return %arg0, %c0_i32 : i32, i32
  }
  func.func @transform_1(%arg0: i32, %arg1: i32) -> (i32, i32) {
    %c0_i32 = arith.constant 0 : i32
    %c0_i32_0 = arith.constant 0 : i32
    return %arg1, %c0_i32 : i32, i32
  }
  func.func @transform_2(%arg0: i32, %arg1: i32) -> (i32, i32) {
    %c0_i32 = arith.constant 0 : i32
    %c0_i32_0 = arith.constant 0 : i32
    return %arg0, %c0_i32 : i32, i32
  }
  func.func @transform_3(%arg0: i32, %arg1: i32) -> (i32, i32) {
    %c0_i32 = arith.constant 0 : i32
    %c0_i32_0 = arith.constant 0 : i32
    return %c0_i32, %arg1 : i32, i32
  }
  func.func @transform_4(%arg0: i32, %arg1: i32) -> (i32, i32) {
    %c0_i32 = arith.constant 0 : i32
    %c0_i32_0 = arith.constant 0 : i32
    return %arg0, %c0_i32 : i32, i32
  }
  func.func @transform_5(%arg0: i32, %arg1: i32) -> (i32, i32) {
    %c0_i32 = arith.constant 0 : i32
    %c0_i32_0 = arith.constant 0 : i32
    return %c0_i32, %arg1 : i32, i32
  }
  func.func @transform_6(%arg0: i32, %arg1: i32) -> (i32, i32) {
    %c0_i32 = arith.constant 0 : i32
    %c0_i32_0 = arith.constant 0 : i32
    return %arg0, %c0_i32 : i32, i32
  }
}

</mosaic_0001>

<llo_original>
// kernel: tpu_custom_call.1
$region0: #{tpu_custom_call.1}
  #allocation0 [shape = 'u32[]', space=smem, size = 0x4, offset = 0x4, fixed_abs, tag = 'smem constant byte address 0x4 - core index']
  #allocation1 [shape = 'u32[144,128]{1,0:T(1,128)}', space=vmem, size = 0x12000, scoped, tag = 'internal scratch']
  #allocation2 [shape = 'f32[64,1]{1,0:T(8,128)}', space=vmem, size = 0x8000, scoped, tag = 'scratch operand']
  #allocation3 [shape = 'f32[64,1]{1,0:T(8,128)}', space=vmem, size = 0x8000, scoped, tag = 'scratch operand']
  #allocation4 [shape = 'f32[64,1]{1,0:T(8,128)}', space=vmem, size = 0x8000, scoped, tag = 'scratch operand']
  #allocation5 [shape = 'f32[64,1]{1,0:T(8,128)}', space=vmem, size = 0x8000, scoped, tag = 'scratch operand']
  %s0 = inlined_call_operand.hbm [shape: bf16[128,128], index: 0, kind: input, shape index: {}]
  %s1 = inlined_call_operand.vmem [shape: bf16[512,128], index: 1, kind: input, shape index: {}]
  %s2 = inlined_call_operand.vmem [shape: s32[128,1], index: 2, kind: input, shape index: {}]
  %s3 = inlined_call_operand.vmem [shape: s32[1,512], index: 3, kind: input, shape index: {}]
  %s4 = inlined_call_operand.vmem [shape: f32[128,1], index: 4, kind: input, shape index: {}]
  %s5 = inlined_call_operand.vmem [shape: f32[1,512], index: 5, kind: input, shape index: {}]
  %s6 = inlined_call_operand.vmem [shape: f32[128,1], index: 6, kind: output, shape index: {}]
  %s7 = sld [smem:[#allocation0]]
  $region69: #{tpu_custom_call.1} parent=0
    _
  %s9 = ssub.s32 1, %s7
  %s10 = scalar_select 0, %s9, %s7
  $region1: #{tpu_custom_call.1} parent=0
    #allocation6 [shape = 'u8[32768]{0}', space=vmem, size = 0x8000, scoped, tag = 'input window, operand 0']
    #allocation7 [shape = 's32[2]{0}', space=sflag, size = 0x8, scoped, tag = 'scoped memory for tpu_custom_call.1']
    %11 = vsyncpa [#allocation7], 0
    %s12 = scalar_lea.sflag [#allocation7], 1
    %13 = vsyncpa %s12, 0
    loop: start=0, step=1, limit=4
    $region2: #{tpu_custom_call.1} parent=1 // loop_pre_header
      _
    $region3: #{tpu_custom_call.1} parent=1 // loop_header
      %s15 = sphi 0, %s19
      %p16 = scmp.ge.s32.totalorder %s15, 4
      %s22 = sphi 0, %s34
      %s23 = sphi 0, %s30
      %s24 = sphi 0, %s22
      %s25 = sphi 0, %s23
      %s26 = sphi 0, %s24
      %s27 = sphi 0, %s25
      %s37 = sphi 0, %s39
      %s40 = sphi 0, %s37
      %s41 = sphi 0, %s40
      %s57 = sphi 0, %s41
      %s63 = sphi 0, %s65
      %s66 = sphi 0, %s63
      %s67 = sphi 0, %s66
      %s83 = sphi 0, %s67
      %s89 = sphi 0, %s91
      %s92 = sphi 0, %s89
      %s93 = sphi 0, %s92
      %s109 = sphi 0, %s93
      %s115 = sphi 0, %s117
      %s118 = sphi 0, %s115
      %s119 = sphi 0, %s118
      %s135 = sphi 0, %s119
      %s141 = sphi 0, %s143
      %s144 = sphi 0, %s141
      %s145 = sphi 0, %s144
      %s161 = sphi 0, %s145
      %s167 = sphi 0, %s169
      %s170 = sphi 0, %s167
      %s171 = sphi 0, %s170
      %s187 = sphi 0, %s171
      %s193 = sphi 0, %s195
      %s196 = sphi 0, %s193
      %s197 = sphi 0, %s196
      %s213 = sphi 0, %s197
    $region4: #{tpu_custom_call.1} parent=1 // loop_header_branch
      %18 = sbr.rel (%p16) target = $region8
    $region5: #{tpu_custom_call.1} parent=1 // loop_body
      %s20 = ssub.s32 %s15, 1
      %s21 = ssub.s32 %s15, 2
      %s28 = sadd.s32 1, %s23
      %p29 = scmp.ge.s32.totalorder %s28, 1
      %s30 = scalar_select %p29, 0, %s28
      %s31 = sadd.s32 1, %s22
      %s32 = scalar_select %p29, %s31, %s22
      %p33 = scmp.ge.s32.totalorder %s32, 2
      %s34 = scalar_select %p33, 0, %s32
      %s35 = ssub.s32 %s22, %s34
      %p36 = scmp.eq.s32.totalorder %s35, 0
      %s38 = sadd.s32 %s37, 1
      %s39 = scalar_select %p36, %s37, %s38
      %p42 = pneg %p36
      %p43 = scmp.eq.s32.totalorder %s15, 1
      %p44 = por %p42, %p43
      %p45 = scmp.ne.s32.totalorder %s37, %s40
      %p46 = scmp.eq.s32.totalorder %s15, 0
      %p47 = por %p45, %p46
      %p48 = scmp.ne.s32.totalorder %s37, %s40
      %p49 = scmp.eq.s32.totalorder %s20, 1
      %p50 = por %p48, %p49
      %p51 = scmp.ne.s32.totalorder %s40, %s41
      %p52 = scmp.eq.s32.totalorder %s20, 0
      %p53 = por %p51, %p52
      %p54 = scmp.ne.s32.totalorder %s40, %s41
      %p55 = scmp.eq.s32.totalorder %s21, 1
      %p56 = por %p54, %p55
      %p58 = scmp.ne.s32.totalorder %s41, %s57
      %p59 = scmp.eq.s32.totalorder %s21, 0
      %p60 = por %p58, %p59
      %s61 = ssub.s32 %s23, %s30
      %p62 = scmp.eq.s32.totalorder %s61, 0
      %s64 = sadd.s32 %s63, 1
      %s65 = scalar_select %p62, %s63, %s64
      %p68 = pneg %p62
      %p69 = scmp.eq.s32.totalorder %s15, 1
      %p70 = por %p68, %p69
      %p71 = scmp.ne.s32.totalorder %s63, %s66
      %p72 = scmp.eq.s32.totalorder %s15, 0
      %p73 = por %p71, %p72
      %p74 = scmp.ne.s32.totalorder %s63, %s66
      %p75 = scmp.eq.s32.totalorder %s20, 1
      %p76 = por %p74, %p75
      %p77 = scmp.ne.s32.totalorder %s66, %s67
      %p78 = scmp.eq.s32.totalorder %s20, 0
      %p79 = por %p77, %p78
      %p80 = scmp.ne.s32.totalorder %s66, %s67
      %p81 = scmp.eq.s32.totalorder %s21, 1
      %p82 = por %p80, %p81
      %p84 = scmp.ne.s32.totalorder %s67, %s83
      %p85 = scmp.eq.s32.totalorder %s21, 0
      %p86 = por %p84, %p85
      %s87 = ssub.s32 %s22, %s34
      %p88 = scmp.eq.s32.totalorder %s87, 0
      %s90 = sadd.s32 %s89, 1
      %s91 = scalar_select %p88, %s89, %s90
      %p94 = pneg %p88
      %p95 = scmp.eq.s32.totalorder %s15, 1
      %p96 = por %p94, %p95
      %p97 = scmp.ne.s32.totalorder %s89, %s92
      %p98 = scmp.eq.s32.totalorder %s15, 0
      %p99 = por %p97, %p98
      %p100 = scmp.ne.s32.totalorder %s89, %s92
      %p101 = scmp.eq.s32.totalorder %s20, 1
      %p102 = por %p100, %p101
      %p103 = scmp.ne.s32.totalorder %s92, %s93
      %p104 = scmp.eq.s32.totalorder %s20, 0
      %p105 = por %p103, %p104
      %p106 = scmp.ne.s32.totalorder %s92, %s93
      %p107 = scmp.eq.s32.totalorder %s21, 1
      %p108 = por %p106, %p107
      %p110 = scmp.ne.s32.totalorder %s93, %s109
      %p111 = scmp.eq.s32.totalorder %s21, 0
      %p112 = por %p110, %p111
      %s113 = ssub.s32 %s23, %s30
      %p114 = scmp.eq.s32.totalorder %s113, 0
      %s116 = sadd.s32 %s115, 1
      %s117 = scalar_select %p114, %s115, %s116
      %p120 = pneg %p114
      %p121 = scmp.eq.s32.totalorder %s15, 1
      %p122 = por %p120, %p121
      %p123 = scmp.ne.s32.totalorder %s115, %s118
      %p124 = scmp.eq.s32.totalorder %s15, 0
      %p125 = por %p123, %p124
      %p126 = scmp.ne.s32.totalorder %s115, %s118
      %p127 = scmp.eq.s32.totalorder %s20, 1
      %p128 = por %p126, %p127
      %p129 = scmp.ne.s32.totalorder %s118, %s119
      %p130 = scmp.eq.s32.totalorder %s20, 0
      %p131 = por %p129, %p130
      %p132 = scmp.ne.s32.totalorder %s118, %s119
      %p133 = scmp.eq.s32.totalorder %s21, 1
      %p134 = por %p132, %p133
      %p136 = scmp.ne.s32.totalorder %s119, %s135
      %p137 = scmp.eq.s32.totalorder %s21, 0
      %p138 = por %p136, %p137
      %s139 = ssub.s32 %s22, %s34
      %p140 = scmp.eq.s32.totalorder %s139, 0
      %s142 = sadd.s32 %s141, 1
      %s143 = scalar_select %p140, %s141, %s142
      %p146 = pneg %p140
      %p147 = scmp.eq.s32.totalorder %s15, 1
      %p148 = por %p146, %p147
      %p149 = scmp.ne.s32.totalorder %s141, %s144
      %p150 = scmp.eq.s32.totalorder %s15, 0
      %p151 = por %p149, %p150
      %p152 = scmp.ne.s32.totalorder %s141, %s144
      %p153 = scmp.eq.s32.totalorder %s20, 1
      %p154 = por %p152, %p153
      %p155 = scmp.ne.s32.totalorder %s144, %s145
      %p156 = scmp.eq.s32.totalorder %s20, 0
      %p157 = por %p155, %p156
      %p158 = scmp.ne.s32.totalorder %s144, %s145
      %p159 = scmp.eq.s32.totalorder %s21, 1
      %p160 = por %p158, %p159
      %p162 = scmp.ne.s32.totalorder %s145, %s161
      %p163 = scmp.eq.s32.totalorder %s21, 0
      %p164 = por %p162, %p163
      %s165 = ssub.s32 %s23, %s30
      %p166 = scmp.eq.s32.totalorder %s165, 0
      %s168 = sadd.s32 %s167, 1
      %s169 = scalar_select %p166, %s167, %s168
      %p172 = pneg %p166
      %p173 = scmp.eq.s32.totalorder %s15, 1
      %p174 = por %p172, %p173
      %p175 = scmp.ne.s32.totalorder %s167, %s170
      %p176 = scmp.eq.s32.totalorder %s15, 0
      %p177 = por %p175, %p176
      %p178 = scmp.ne.s32.totalorder %s167, %s170
      %p179 = scmp.eq.s32.totalorder %s20, 1
      %p180 = por %p178, %p179
      %p181 = scmp.ne.s32.totalorder %s170, %s171
      %p182 = scmp.eq.s32.totalorder %s20, 0
      %p183 = por %p181, %p182
      %p184 = scmp.ne.s32.totalorder %s170, %s171
      %p185 = scmp.eq.s32.totalorder %s21, 1
      %p186 = por %p184, %p185
      %p188 = scmp.ne.s32.totalorder %s171, %s187
      %p189 = scmp.eq.s32.totalorder %s21, 0
      %p190 = por %p188, %p189
      %s191 = ssub.s32 %s22, %s34
      %p192 = scmp.eq.s32.totalorder %s191, 0
      %s194 = sadd.s32 %s193, 1
      %s195 = scalar_select %p192, %s193, %s194
      %p198 = pneg %p192
      %p199 = scmp.eq.s32.totalorder %s15, 1
      %p200 = por %p198, %p199
      %p201 = scmp.ne.s32.totalorder %s193, %s196
      %p202 = scmp.eq.s32.totalorder %s15, 0
      %p203 = por %p201, %p202
      %p204 = scmp.ne.s32.totalorder %s193, %s196
      %p205 = scmp.eq.s32.totalorder %s20, 1
      %p206 = por %p204, %p205
      %p207 = scmp.ne.s32.totalorder %s196, %s197
      %p208 = scmp.eq.s32.totalorder %s20, 0
      %p209 = por %p207, %p208
      %p210 = scmp.ne.s32.totalorder %s196, %s197
      %p211 = scmp.eq.s32.totalorder %s21, 1
      %p212 = por %p210, %p211
      %p214 = scmp.ne.s32.totalorder %s197, %s213
      %p215 = scmp.eq.s32.totalorder %s21, 0
      %p216 = por %p214, %p215
      %p217 = scmp.le.s32.totalorder 1, %s15
      %p218 = scmp.lt.s32.totalorder %s15, 3
      %p219 = pnand %p217, %p218
      %p220 = pneg %p219
      // Predicated region
      $region9: #{tpu_custom_call.1} parent=5 // pred_check
        _
      $region10: #{tpu_custom_call.1} parent=5 // pred_check_branch
        %222 = sbr.rel (%p219) target = $region12
      $region11: #{tpu_custom_call.1} parent=5 // pred_region
        %s223 = ssub.s32 %s15, 1
        // Predicated region
        $region13: #{tpu_custom_call.1} parent=11 // pred_check
          %p224 = pneg %p79
        $region14: #{tpu_custom_call.1} parent=11 // pred_check_branch
          %226 = sbr.rel (%p224) target = $region16
        $region15: #{tpu_custom_call.1} parent=11 // pred_region
          %s227 = smul.u32 64, %s25
          %p228 = scmp.lt.s32.totalorder %s227, 63
          %s229 = scalar_select %p228, %s227, 63
          %s230 = smul.addr %s229, 4
          %s231 = scalar_lea.vmem %s1, %s230
          %s232 = smul.u32 64, %s25
        $region16: #{tpu_custom_call.1} parent=11 // pred_fallthru
          _
        // Predicated region
        $region17: #{tpu_custom_call.1} parent=11 // pred_check
          %p233 = pneg %p131
        $region18: #{tpu_custom_call.1} parent=11 // pred_check_branch
          %235 = sbr.rel (%p233) target = $region20
        $region19: #{tpu_custom_call.1} parent=11 // pred_region
          %s236 = smul.u32 4, %s25
          %p237 = scmp.lt.s32.totalorder %s236, 3
          %s238 = scalar_select %p237, %s236, 3
          %s239 = scalar_lea.vmem %s3, %s238
          %s240 = smul.u32 4, %s25
        $region20: #{tpu_custom_call.1} parent=11 // pred_fallthru
          _
        // Predicated region
        $region21: #{tpu_custom_call.1} parent=11 // pred_check
          %p241 = pneg %p183
        $region22: #{tpu_custom_call.1} parent=11 // pred_check_branch
          %243 = sbr.rel (%p241) target = $region24
        $region23: #{tpu_custom_call.1} parent=11 // pred_region
          %s244 = smul.u32 4, %s25
          %p245 = scmp.lt.s32.totalorder %s244, 3
          %s246 = scalar_select %p245, %s244, 3
          %s247 = scalar_lea.vmem %s5, %s246
          %s248 = smul.u32 4, %s25
        $region24: #{tpu_custom_call.1} parent=11 // pred_fallthru
          _
      $region12: #{tpu_custom_call.1} parent=5 // pred_fallthru
        _
      %p249 = scmp.lt.s32.totalorder %s15, 2
      // Predicated region
      $region25: #{tpu_custom_call.1} parent=5 // pred_check
        %p250 = pneg %p249
      $region26: #{tpu_custom_call.1} parent=5 // pred_check_branch
        %252 = sbr.rel (%p250) target = $region28
      $region27: #{tpu_custom_call.1} parent=5 // pred_region
        // Predicated region
        $region29: #{tpu_custom_call.1} parent=27 // pred_check
          %p253 = pneg %p47
        $region30: #{tpu_custom_call.1} parent=27 // pred_check_branch
          %255 = sbr.rel (%p253) target = $region32
        $region31: #{tpu_custom_call.1} parent=27 // pred_region
          %s256 = sand.u32 %s37, 1
          %s257 = scalar_lea.sflag [#allocation7], %s256
          %s258 = sand.u32 %s37, 1
          %s259 = smul.addr %s258, 32
          %s260 = scalar_lea.vmem [#allocation6], %s259
          %s261 = smul.u32 8, %s22
          %s263 = ssub.s32 512, 512
          %264 = vsyncadd %s257, %s263
          %s265 = smul.addr %s261, 64
          %s266 = scalar_lea.hbm %s0, %s265
          %s267 = sshll.u32 %s260, 4
          %s268 = int_to_ptr.vmem [resolvable:$true] %s267
          %273 = dma.hbm_to_vmem [thread:$0]  %s266, 512, %s268, %s257, 64, 64, 4
        $region32: #{tpu_custom_call.1} parent=27 // pred_fallthru
          _
        // Predicated region
        $region33: #{tpu_custom_call.1} parent=27 // pred_check
          %p274 = pneg %p99
        $region34: #{tpu_custom_call.1} parent=27 // pred_check_branch
          %276 = sbr.rel (%p274) target = $region36
        $region35: #{tpu_custom_call.1} parent=27 // pred_region
          %s277 = smul.u32 8, %s22
          %p278 = scmp.lt.s32.totalorder %s277, 15
          %s279 = scalar_select %p278, %s277, 15
          %s280 = smul.addr %s279, 8
          %s281 = scalar_lea.vmem %s2, %s280
          %s282 = smul.u32 8, %s22
        $region36: #{tpu_custom_call.1} parent=27 // pred_fallthru
          _
        // Predicated region
        $region37: #{tpu_custom_call.1} parent=27 // pred_check
          %p283 = pneg %p151
        $region38: #{tpu_custom_call.1} parent=27 // pred_check_branch
          %285 = sbr.rel (%p283) target = $region40
        $region39: #{tpu_custom_call.1} parent=27 // pred_region
          %s286 = smul.u32 8, %s22
          %p287 = scmp.lt.s32.totalorder %s286, 15
          %s288 = scalar_select %p287, %s286, 15
          %s289 = smul.addr %s288, 8
          %s290 = scalar_lea.vmem %s4, %s289
          %s291 = smul.u32 8, %s22
        $region40: #{tpu_custom_call.1} parent=27 // pred_fallthru
          _
      $region28: #{tpu_custom_call.1} parent=5 // pred_fallthru
        _
      %p292 = scmp.le.s32.totalorder 1, %s15
      %p293 = scmp.lt.s32.totalorder %s15, 3
      %p294 = pnand %p292, %p293
      %p295 = pneg %p294
      // Predicated region
      $region41: #{tpu_custom_call.1} parent=5 // pred_check
        _
      $region42: #{tpu_custom_call.1} parent=5 // pred_check_branch
        %297 = sbr.rel (%p294) target = $region44
      $region43: #{tpu_custom_call.1} parent=5 // pred_region
        %s298 = ssub.s32 %s15, 1
        %s299 = sand.u32 %s40, 1
        %s300 = scalar_lea.sflag [#allocation7], %s299
        %s301 = sand.u32 %s40, 1
        %s302 = smul.addr %s301, 32
        %s303 = scalar_lea.vmem [#allocation6], %s302
        // Predicated region
        $region45: #{tpu_custom_call.1} parent=43 // pred_check
          %p304 = pneg %p53
        $region46: #{tpu_custom_call.1} parent=43 // pred_check_branch
          %306 = sbr.rel (%p304) target = $region48
        $region47: #{tpu_custom_call.1} parent=43 // pred_region
          %307 = dma.done %s300, 512
        $region48: #{tpu_custom_call.1} parent=43 // pred_fallthru
          _
        %s308 = sand.u32 %s40, 1
        %s309 = scalar_lea.sflag [#allocation7], %s308
        %s310 = sand.u32 %s40, 1
        %s311 = smul.addr %s310, 32
        %s312 = scalar_lea.vmem [#allocation6], %s311
        %p313 = pneg %p53
        %p314 = pneg %p50
        %s315 = smul.u32 64, %s25
        %p316 = scmp.lt.s32.totalorder %s315, 63
        %s317 = scalar_select %p316, %s315, 63
        %s318 = smul.addr %s317, 4
        %s319 = scalar_lea.vmem %s1, %s318
        %p320 = pneg %p79
        %p321 = pneg %p76
        %s322 = smul.u32 8, %s24
        %p323 = scmp.lt.s32.totalorder %s322, 15
        %s324 = scalar_select %p323, %s322, 15
        %s325 = smul.addr %s324, 8
        %s326 = scalar_lea.vmem %s2, %s325
        %p327 = pneg %p105
        %p328 = pneg %p102
        %s329 = smul.u32 4, %s25
        %p330 = scmp.lt.s32.totalorder %s329, 3
        %s331 = scalar_select %p330, %s329, 3
        %s332 = scalar_lea.vmem %s3, %s331
        %p333 = pneg %p131
        %p334 = pneg %p128
        %s335 = smul.u32 8, %s24
        %p336 = scmp.lt.s32.totalorder %s335, 15
        %s337 = scalar_select %p336, %s335, 15
        %s338 = smul.addr %s337, 8
        %s339 = scalar_lea.vmem %s4, %s338
        %p340 = pneg %p157
        %p341 = pneg %p154
        %s342 = smul.u32 4, %s25
        %p343 = scmp.lt.s32.totalorder %s342, 3
        %s344 = scalar_select %p343, %s342, 3
        %s345 = scalar_lea.vmem %s5, %s344
        %p346 = pneg %p183
        %p347 = pneg %p180
        %p348 = pneg %p209
        %p349 = pneg %p206
        %s350 = smul.u32 8, %s24
        %p351 = scmp.lt.s32.totalorder %s350, 15
        %s352 = scalar_select %p351, %s350, 15
        %s353 = smul.addr %s352, 8
        %s354 = scalar_lea.vmem %s6, %s353
        %s355 = smul.u32 8, %s24
        %s356 = smul.u32 64, %s25
        %p357 = scmp.lt.s32.totalorder %s356, 63
        %s358 = scalar_select %p357, %s356, 63
        %s359 = smul.addr %s358, 4
        %s360 = scalar_lea.vmem %s1, %s359
        %s361 = smul.u32 64, %s25
        %s362 = smul.u32 8, %s24
        %p363 = scmp.lt.s32.totalorder %s362, 15
        %s364 = scalar_select %p363, %s362, 15
        %s365 = smul.addr %s364, 8
        %s366 = scalar_lea.vmem %s2, %s365
        %s367 = smul.u32 8, %s24
        %s368 = smul.u32 4, %s25
        %p369 = scmp.lt.s32.totalorder %s368, 3
        %s370 = scalar_select %p369, %s368, 3
        %s371 = scalar_lea.vmem %s3, %s370
        %s372 = smul.u32 4, %s25
        %s373 = smul.u32 8, %s24
        %p374 = scmp.lt.s32.totalorder %s373, 15
        %s375 = scalar_select %p374, %s373, 15
        %s376 = smul.addr %s375, 8
        %s377 = scalar_lea.vmem %s4, %s376
        %s378 = smul.u32 8, %s24
        %s379 = smul.u32 4, %s25
        %p380 = scmp.lt.s32.totalorder %s379, 3
        %s381 = scalar_select %p380, %s379, 3
        %s382 = scalar_lea.vmem %s5, %s381
        %s383 = smul.u32 4, %s25
        %s384 = smul.u32 8, %s24
        %p385 = scmp.lt.s32.totalorder %s384, 15
        %s386 = scalar_select %p385, %s384, 15
        %s387 = smul.addr %s386, 8
        %s388 = scalar_lea.vmem %s6, %s387
        %s389 = smul.u32 8, %s24
        %p391 = scmp.eq.s32.totalorder %s25, 0
        // Predicated region
        $region49: #{tpu_custom_call.1} parent=43 // pred_check
          %p392 = pneg %p391
        $region50: #{tpu_custom_call.1} parent=43 // pred_check_branch
          %394 = sbr.rel (%p392) target = $region52
        $region51: #{tpu_custom_call.1} parent=43 // pred_region
          %vm395 = vcmask 7168
          %396 = vst.msk [vmem:[#allocation2] sm:$0xff] %vm395, -1e+30
          %397 = vst.msk [vmem:[#allocation2 + $0x8] sm:$0xff] %vm395, -1e+30
          %398 = vst.msk [vmem:[#allocation2 + $0x10] sm:$0xff] %vm395, -1e+30
          %399 = vst.msk [vmem:[#allocation2 + $0x18] sm:$0xff] %vm395, -1e+30
          %400 = vst.msk [vmem:[#allocation2 + $0x20] sm:$0xff] %vm395, -1e+30
          %401 = vst.msk [vmem:[#allocation2 + $0x28] sm:$0xff] %vm395, -1e+30
          %402 = vst.msk [vmem:[#allocation2 + $0x30] sm:$0xff] %vm395, -1e+30
          %403 = vst.msk [vmem:[#allocation2 + $0x38] sm:$0xff] %vm395, -1e+30
          %404 = vst.msk [vmem:[#allocation3] sm:$0xff] %vm395, 0.0
          %405 = vst.msk [vmem:[#allocation3 + $0x8] sm:$0xff] %vm395, 0.0
          %406 = vst.msk [vmem:[#allocation3 + $0x10] sm:$0xff] %vm395, 0.0
          %407 = vst.msk [vmem:[#allocation3 + $0x18] sm:$0xff] %vm395, 0.0
          %408 = vst.msk [vmem:[#allocation3 + $0x20] sm:$0xff] %vm395, 0.0
          %409 = vst.msk [vmem:[#allocation3 + $0x28] sm:$0xff] %vm395, 0.0
          %410 = vst.msk [vmem:[#allocation3 + $0x30] sm:$0xff] %vm395, 0.0
          %411 = vst.msk [vmem:[#allocation3 + $0x38] sm:$0xff] %vm395, 0.0
          %412 = vst.msk [vmem:[#allocation4] sm:$0xff] %vm395, 0.0
          %413 = vst.msk [vmem:[#allocation4 + $0x8] sm:$0xff] %vm395, 0.0
          %414 = vst.msk [vmem:[#allocation4 + $0x10] sm:$0xff] %vm395, 0.0
          %415 = vst.msk [vmem:[#allocation4 + $0x18] sm:$0xff] %vm395, 0.0
          %416 = vst.msk [vmem:[#allocation4 + $0x20] sm:$0xff] %vm395, 0.0
          %417 = vst.msk [vmem:[#allocation4 + $0x28] sm:$0xff] %vm395, 0.0
          %418 = vst.msk [vmem:[#allocation4 + $0x30] sm:$0xff] %vm395, 0.0
          %419 = vst.msk [vmem:[#allocation4 + $0x38] sm:$0xff] %vm395, 0.0
          %420 = vst.msk [vmem:[#allocation5] sm:$0xff] %vm395, 0.0
          %421 = vst.msk [vmem:[#allocation5 + $0x8] sm:$0xff] %vm395, 0.0
          %422 = vst.msk [vmem:[#allocation5 + $0x10] sm:$0xff] %vm395, 0.0
          %423 = vst.msk [vmem:[#allocation5 + $0x18] sm:$0xff] %vm395, 0.0
          %424 = vst.msk [vmem:[#allocation5 + $0x20] sm:$0xff] %vm395, 0.0
          %425 = vst.msk [vmem:[#allocation5 + $0x28] sm:$0xff] %vm395, 0.0
          %426 = vst.msk [vmem:[#allocation5 + $0x30] sm:$0xff] %vm395, 0.0
          %427 = vst.msk [vmem:[#allocation5 + $0x38] sm:$0xff] %vm395, 0.0
        $region52: #{tpu_custom_call.1} parent=43 // pred_fallthru
          _
        %v428 = vld [vmem:[%s303] sm:$0xf]
        %v429 = vld [vmem:[%s303 + $0x4] sm:$0xf]
        %v430 = vld [vmem:[%s303 + $0x8] sm:$0xf]
        %v431 = vld [vmem:[%s303 + $0xc] sm:$0xf]
        %v432 = vld [vmem:[%s303 + $0x10] sm:$0xf]
        %v433 = vld [vmem:[%s303 + $0x14] sm:$0xf]
        %v434 = vld [vmem:[%s303 + $0x18] sm:$0xf]
        %v435 = vld [vmem:[%s303 + $0x1c] sm:$0xf]
        %v436 = vld [vmem:[%s360] sm:$0xf]
        %v437 = vld [vmem:[%s360 + $0x4] sm:$0xf]
        %v438 = vld [vmem:[%s360 + $0x8] sm:$0xf]
        %v439 = vld [vmem:[%s360 + $0xc] sm:$0xf]
        %v440 = vld [vmem:[%s360 + $0x10] sm:$0xf]
        %v441 = vld [vmem:[%s360 + $0x14] sm:$0xf]
        %v442 = vld [vmem:[%s360 + $0x18] sm:$0xf]
        %v443 = vld [vmem:[%s360 + $0x1c] sm:$0xf]
        %v444 = vld [vmem:[%s360 + $0x20] sm:$0xf]
        %v445 = vld [vmem:[%s360 + $0x24] sm:$0xf]
        %v446 = vld [vmem:[%s360 + $0x28] sm:$0xf]
        %v447 = vld [vmem:[%s360 + $0x2c] sm:$0xf]
        %v448 = vld [vmem:[%s360 + $0x30] sm:$0xf]
        %v449 = vld [vmem:[%s360 + $0x34] sm:$0xf]
        %v450 = vld [vmem:[%s360 + $0x38] sm:$0xf]
        %v451 = vld [vmem:[%s360 + $0x3c] sm:$0xf]
        %v452 = vld [vmem:[%s360 + $0x40] sm:$0xf]
        %v453 = vld [vmem:[%s360 + $0x44] sm:$0xf]
        %v454 = vld [vmem:[%s360 + $0x48] sm:$0xf]
        %v455 = vld [vmem:[%s360 + $0x4c] sm:$0xf]
        %v456 = vld [vmem:[%s360 + $0x50] sm:$0xf]
        %v457 = vld [vmem:[%s360 + $0x54] sm:$0xf]
        %v458 = vld [vmem:[%s360 + $0x58] sm:$0xf]
        %v459 = vld [vmem:[%s360 + $0x5c] sm:$0xf]
        %v460 = vld [vmem:[%s360 + $0x60] sm:$0xf]
        %v461 = vld [vmem:[%s360 + $0x64] sm:$0xf]
        %v462 = vld [vmem:[%s360 + $0x68] sm:$0xf]
        %v463 = vld [vmem:[%s360 + $0x6c] sm:$0xf]
        %v464 = vld [vmem:[%s360 + $0x70] sm:$0xf]
        %v465 = vld [vmem:[%s360 + $0x74] sm:$0xf]
        %v466 = vld [vmem:[%s360 + $0x78] sm:$0xf]
        %v467 = vld [vmem:[%s360 + $0x7c] sm:$0xf]
        %v468 = vld [vmem:[%s360 + $0x80] sm:$0xf]
        %v469 = vld [vmem:[%s360 + $0x84] sm:$0xf]
        %v470 = vld [vmem:[%s360 + $0x88] sm:$0xf]
        %v471 = vld [vmem:[%s360 + $0x8c] sm:$0xf]
        %v472 = vld [vmem:[%s360 + $0x90] sm:$0xf]
        %v473 = vld [vmem:[%s360 + $0x94] sm:$0xf]
        %v474 = vld [vmem:[%s360 + $0x98] sm:$0xf]
        %v475 = vld [vmem:[%s360 + $0x9c] sm:$0xf]
        %v476 = vld [vmem:[%s360 + $0xa0] sm:$0xf]
        %v477 = vld [vmem:[%s360 + $0xa4] sm:$0xf]
        %v478 = vld [vmem:[%s360 + $0xa8] sm:$0xf]
        %v479 = vld [vmem:[%s360 + $0xac] sm:$0xf]
        %v480 = vld [vmem:[%s360 + $0xb0] sm:$0xf]
        %v481 = vld [vmem:[%s360 + $0xb4] sm:$0xf]
        %v482 = vld [vmem:[%s360 + $0xb8] sm:$0xf]
        %v483 = vld [vmem:[%s360 + $0xbc] sm:$0xf]
        %v484 = vld [vmem:[%s360 + $0xc0] sm:$0xf]
        %v485 = vld [vmem:[%s360 + $0xc4] sm:$0xf]
        %v486 = vld [vmem:[%s360 + $0xc8] sm:$0xf]
        %v487 = vld [vmem:[%s360 + $0xcc] sm:$0xf]
        %v488 = vld [vmem:[%s360 + $0xd0] sm:$0xf]
        %v489 = vld [vmem:[%s360 + $0xd4] sm:$0xf]
        %v490 = vld [vmem:[%s360 + $0xd8] sm:$0xf]
        %v491 = vld [vmem:[%s360 + $0xdc] sm:$0xf]
        %v492 = vld [vmem:[%s360 + $0xe0] sm:$0xf]
        %v493 = vld [vmem:[%s360 + $0xe4] sm:$0xf]
        %v494 = vld [vmem:[%s360 + $0xe8] sm:$0xf]
        %v495 = vld [vmem:[%s360 + $0xec] sm:$0xf]
        %v496 = vld [vmem:[%s360 + $0xf0] sm:$0xf]
        %v497 = vld [vmem:[%s360 + $0xf4] sm:$0xf]
        %v498 = vld [vmem:[%s360 + $0xf8] sm:$0xf]
        %v499 = vld [vmem:[%s360 + $0xfc] sm:$0xf]
        %v508 = vunpack.c.l.b16 %v428
        %v509 = vunpack.c.l.b16 %v429
        %v510 = vunpack.c.l.b16 %v430
        %v511 = vunpack.c.l.b16 %v431
        %v512 = vunpack.c.l.b16 %v432
        %v513 = vunpack.c.l.b16 %v433
        %v514 = vunpack.c.l.b16 %v434
        %v515 = vunpack.c.l.b16 %v435
        %v516 = vpack.c.b16 %v509, %v508
        %v517 = vpack.c.b16 %v511, %v510
        %v518 = vpack.c.b16 %v513, %v512
        %v519 = vpack.c.b16 %v515, %v514
        %v588 = vunpack.c.l.b16 %v436
        %v589 = vunpack.c.l.b16 %v437
        %v590 = vunpack.c.l.b16 %v438
        %v591 = vunpack.c.l.b16 %v439
        %v592 = vunpack.c.l.b16 %v440
        %v593 = vunpack.c.l.b16 %v441
        %v594 = vunpack.c.l.b16 %v442
        %v595 = vunpack.c.l.b16 %v443
        %v596 = vunpack.c.l.b16 %v444
        %v597 = vunpack.c.l.b16 %v445
        %v598 = vunpack.c.l.b16 %v446
        %v599 = vunpack.c.l.b16 %v447
        %v600 = vunpack.c.l.b16 %v448
        %v601 = vunpack.c.l.b16 %v449
        %v602 = vunpack.c.l.b16 %v450
        %v603 = vunpack.c.l.b16 %v451
        %v604 = vunpack.c.l.b16 %v452
        %v605 = vunpack.c.l.b16 %v453
        %v606 = vunpack.c.l.b16 %v454
        %v607 = vunpack.c.l.b16 %v455
        %v608 = vunpack.c.l.b16 %v456
        %v609 = vunpack.c.l.b16 %v457
        %v610 = vunpack.c.l.b16 %v458
        %v611 = vunpack.c.l.b16 %v459
        %v612 = vunpack.c.l.b16 %v460
        %v613 = vunpack.c.l.b16 %v461
        %v614 = vunpack.c.l.b16 %v462
        %v615 = vunpack.c.l.b16 %v463
        %v616 = vunpack.c.l.b16 %v464
        %v617 = vunpack.c.l.b16 %v465
        %v618 = vunpack.c.l.b16 %v466
        %v619 = vunpack.c.l.b16 %v467
        %v620 = vunpack.c.l.b16 %v468
        %v621 = vunpack.c.l.b16 %v469
        %v622 = vunpack.c.l.b16 %v470
        %v623 = vunpack.c.l.b16 %v471
        %v624 = vunpack.c.l.b16 %v472
        %v625 = vunpack.c.l.b16 %v473
        %v626 = vunpack.c.l.b16 %v474
        %v627 = vunpack.c.l.b16 %v475
        %v628 = vunpack.c.l.b16 %v476
        %v629 = vunpack.c.l.b16 %v477
        %v630 = vunpack.c.l.b16 %v478
        %v631 = vunpack.c.l.b16 %v479
        %v632 = vunpack.c.l.b16 %v480
        %v633 = vunpack.c.l.b16 %v481
        %v634 = vunpack.c.l.b16 %v482
        %v635 = vunpack.c.l.b16 %v483
        %v636 = vunpack.c.l.b16 %v484
        %v637 = vunpack.c.l.b16 %v485
        %v638 = vunpack.c.l.b16 %v486
        %v639 = vunpack.c.l.b16 %v487
        %v640 = vunpack.c.l.b16 %v488
        %v641 = vunpack.c.l.b16 %v489
        %v642 = vunpack.c.l.b16 %v490
        %v643 = vunpack.c.l.b16 %v491
        %v644 = vunpack.c.l.b16 %v492
        %v645 = vunpack.c.l.b16 %v493
        %v646 = vunpack.c.l.b16 %v494
        %v647 = vunpack.c.l.b16 %v495
        %v648 = vunpack.c.l.b16 %v496
        %v649 = vunpack.c.l.b16 %v497
        %v650 = vunpack.c.l.b16 %v498
        %v651 = vunpack.c.l.b16 %v499
        %v652 = vpack.c.b16 %v589, %v588
        %v653 = vpack.c.b16 %v591, %v590
        %v654 = vpack.c.b16 %v593, %v592
        %v655 = vpack.c.b16 %v595, %v594
        %v656 = vpack.c.b16 %v597, %v596
        %v657 = vpack.c.b16 %v599, %v598
        %v658 = vpack.c.b16 %v601, %v600
        %v659 = vpack.c.b16 %v603, %v602
        %v660 = vpack.c.b16 %v605, %v604
        %v661 = vpack.c.b16 %v607, %v606
        %v662 = vpack.c.b16 %v609, %v608
        %v663 = vpack.c.b16 %v611, %v610
        %v664 = vpack.c.b16 %v613, %v612
        %v665 = vpack.c.b16 %v615, %v614
        %v666 = vpack.c.b16 %v617, %v616
        %v667 = vpack.c.b16 %v619, %v618
        %v668 = vpack.c.b16 %v621, %v620
        %v669 = vpack.c.b16 %v623, %v622
        %v670 = vpack.c.b16 %v625, %v624
        %v671 = vpack.c.b16 %v627, %v626
        %v672 = vpack.c.b16 %v629, %v628
        %v673 = vpack.c.b16 %v631, %v630
        %v674 = vpack.c.b16 %v633, %v632
        %v675 = vpack.c.b16 %v635, %v634
        %v676 = vpack.c.b16 %v637, %v636
        %v677 = vpack.c.b16 %v639, %v638
        %v678 = vpack.c.b16 %v641, %v640
        %v679 = vpack.c.b16 %v643, %v642
        %v680 = vpack.c.b16 %v645, %v644
        %v681 = vpack.c.b16 %v647, %v646
        %v682 = vpack.c.b16 %v649, %v648
        %v683 = vpack.c.b16 %v651, %v650
        %716 = vmatprep.subr.bf16.mxu0 0
        %717 = vmatpush1.bf16.xpose.msra.mxu0 %v652
        %718 = vmatprep.subr.bf16.mxu0 0
        %719 = vmatpush1.bf16.xpose.msra.mxu0 %v653
        %720 = vmatprep.subr.bf16.mxu0 0
        %721 = vmatpush1.bf16.xpose.msra.mxu0 %v654
        %722 = vmatprep.subr.bf16.mxu0 0
        %723 = vmatpush1.bf16.xpose.msra.mxu0 %v655
        %724 = vmatprep.subr.bf16.mxu0 0
        %725 = vmatpush1.bf16.xpose.msra.mxu0 %v656
        %726 = vmatprep.subr.bf16.mxu0 0
        %727 = vmatpush1.bf16.xpose.msra.mxu0 %v657
        %728 = vmatprep.subr.bf16.mxu0 0
        %729 = vmatpush1.bf16.xpose.msra.mxu0 %v658
        %730 = vmatprep.subr.bf16.mxu0 0
        %731 = vmatpush1.bf16.xpose.msra.mxu0 %v659
        %732 = vmatprep.subr.bf16.mxu0 0
        %733 = vmatpush1.bf16.xpose.msra.mxu0 %v660
        %734 = vmatprep.subr.bf16.mxu0 0
        %735 = vmatpush1.bf16.xpose.msra.mxu0 %v661
        %736 = vmatprep.subr.bf16.mxu0 0
        %737 = vmatpush1.bf16.xpose.msra.mxu0 %v662
        %738 = vmatprep.subr.bf16.mxu0 0
        %739 = vmatpush1.bf16.xpose.msra.mxu0 %v663
        %740 = vmatprep.subr.bf16.mxu0 0
        %741 = vmatpush1.bf16.xpose.msra.mxu0 %v664
        %742 = vmatprep.subr.bf16.mxu0 0
        %743 = vmatpush1.bf16.xpose.msra.mxu0 %v665
        %744 = vmatprep.subr.bf16.mxu0 0
        %745 = vmatpush1.bf16.xpose.msra.mxu0 %v666
        %746 = vmatprep.subr.bf16.mxu0 0
        %747 = vmatpush1.bf16.xpose.msra.mxu0 %v667
        %748 = vmatprep.mubr.bf16.mxu0 0
        %749 = vmatmul.mubr.bf16.gmra.mrb[0].mxu0 %v516
        %v750 = vpop.f32.mrb[0].mxu0
        %v751 = vadd.f32 0.0, %v750
        %v752 = vpop.f32.mrb[0].mxu0
        %v753 = vadd.f32 0.0, %v752
        %v754 = vpop.f32.mrb[0].mxu0
        %v755 = vadd.f32 0.0, %v754
        %v756 = vpop.f32.mrb[0].mxu0
        %v757 = vadd.f32 0.0, %v756
        %758 = vmatprep.mubr.bf16.mxu0 0
        %759 = vmatmul.mubr.bf16.gmra.mrb[0].mxu0 %v517
        %v760 = vpop.f32.mrb[0].mxu0
        %v761 = vadd.f32 0.0, %v760
        %v762 = vpop.f32.mrb[0].mxu0
        %v763 = vadd.f32 0.0, %v762
        %v764 = vpop.f32.mrb[0].mxu0
        %v765 = vadd.f32 0.0, %v764
        %v766 = vpop.f32.mrb[0].mxu0
        %v767 = vadd.f32 0.0, %v766
        %768 = vmatprep.mubr.bf16.mxu0 0
        %769 = vmatmul.mubr.bf16.gmra.mrb[0].mxu0 %v518
        %v770 = vpop.f32.mrb[0].mxu0
        %v771 = vadd.f32 0.0, %v770
        %v772 = vpop.f32.mrb[0].mxu0
        %v773 = vadd.f32 0.0, %v772
        %v774 = vpop.f32.mrb[0].mxu0
        %v775 = vadd.f32 0.0, %v774
        %v776 = vpop.f32.mrb[0].mxu0
        %v777 = vadd.f32 0.0, %v776
        %778 = vmatprep.mubr.bf16.mxu0 0
        %779 = vmatmul.mubr.bf16.gmra.mrb[0].mxu0 %v519
        %v780 = vpop.f32.mrb[0].mxu0
        %v781 = vadd.f32 0.0, %v780
        %v782 = vpop.f32.mrb[0].mxu0
        %v783 = vadd.f32 0.0, %v782
        %v784 = vpop.f32.mrb[0].mxu0
        %v785 = vadd.f32 0.0, %v784
        %v786 = vpop.f32.mrb[0].mxu0
        %v787 = vadd.f32 0.0, %v786
        %788 = vdwg.mxu0
        %789 = vmatprep.subr.bf16.mxu0 0
        %790 = vmatpush1.bf16.xpose.msra.mxu0 %v668
        %791 = vmatprep.subr.bf16.mxu0 0
        %792 = vmatpush1.bf16.xpose.msra.mxu0 %v669
        %793 = vmatprep.subr.bf16.mxu0 0
        %794 = vmatpush1.bf16.xpose.msra.mxu0 %v670
        %795 = vmatprep.subr.bf16.mxu0 0
        %796 = vmatpush1.bf16.xpose.msra.mxu0 %v671
        %797 = vmatprep.subr.bf16.mxu0 0
        %798 = vmatpush1.bf16.xpose.msra.mxu0 %v672
        %799 = vmatprep.subr.bf16.mxu0 0
        %800 = vmatpush1.bf16.xpose.msra.mxu0 %v673
        %801 = vmatprep.subr.bf16.mxu0 0
        %802 = vmatpush1.bf16.xpose.msra.mxu0 %v674
        %803 = vmatprep.subr.bf16.mxu0 0
        %804 = vmatpush1.bf16.xpose.msra.mxu0 %v675
        %805 = vmatprep.subr.bf16.mxu0 0
        %806 = vmatpush1.bf16.xpose.msra.mxu0 %v676
        %807 = vmatprep.subr.bf16.mxu0 0
        %808 = vmatpush1.bf16.xpose.msra.mxu0 %v677
        %809 = vmatprep.subr.bf16.mxu0 0
        %810 = vmatpush1.bf16.xpose.msra.mxu0 %v678
        %811 = vmatprep.subr.bf16.mxu0 0
        %812 = vmatpush1.bf16.xpose.msra.mxu0 %v679
        %813 = vmatprep.subr.bf16.mxu0 0
        %814 = vmatpush1.bf16.xpose.msra.mxu0 %v680
        %815 = vmatprep.subr.bf16.mxu0 0
        %816 = vmatpush1.bf16.xpose.msra.mxu0 %v681
        %817 = vmatprep.subr.bf16.mxu0 0
        %818 = vmatpush1.bf16.xpose.msra.mxu0 %v682
        %819 = vmatprep.subr.bf16.mxu0 0
        %820 = vmatpush1.bf16.xpose.msra.mxu0 %v683
        %821 = vmatprep.mubr.bf16.mxu0 0
        %822 = vmatmul.mubr.bf16.gmra.mrb[0].mxu0 %v516
        %v823 = vpop.f32.mrb[0].mxu0
        %v824 = vadd.f32 0.0, %v823
        %v825 = vpop.f32.mrb[0].mxu0
        %v826 = vadd.f32 0.0, %v825
        %v827 = vpop.f32.mrb[0].mxu0
        %v828 = vadd.f32 0.0, %v827
        %v829 = vpop.f32.mrb[0].mxu0
        %v830 = vadd.f32 0.0, %v829
        %831 = vmatprep.mubr.bf16.mxu0 0
        %832 = vmatmul.mubr.bf16.gmra.mrb[0].mxu0 %v517
        %v833 = vpop.f32.mrb[0].mxu0
        %v834 = vadd.f32 0.0, %v833
        %v835 = vpop.f32.mrb[0].mxu0
        %v836 = vadd.f32 0.0, %v835
        %v837 = vpop.f32.mrb[0].mxu0
        %v838 = vadd.f32 0.0, %v837
        %v839 = vpop.f32.mrb[0].mxu0
        %v840 = vadd.f32 0.0, %v839
        %841 = vmatprep.mubr.bf16.mxu0 0
        %842 = vmatmul.mubr.bf16.gmra.mrb[0].mxu0 %v518
        %v843 = vpop.f32.mrb[0].mxu0
        %v844 = vadd.f32 0.0, %v843
        %v845 = vpop.f32.mrb[0].mxu0
        %v846 = vadd.f32 0.0, %v845
        %v847 = vpop.f32.mrb[0].mxu0
        %v848 = vadd.f32 0.0, %v847
        %v849 = vpop.f32.mrb[0].mxu0
        %v850 = vadd.f32 0.0, %v849
        %851 = vmatprep.mubr.bf16.mxu0 0
        %852 = vmatmul.mubr.bf16.gmra.mrb[0].mxu0 %v519
        %v853 = vpop.f32.mrb[0].mxu0
        %v854 = vadd.f32 0.0, %v853
        %v855 = vpop.f32.mrb[0].mxu0
        %v856 = vadd.f32 0.0, %v855
        %v857 = vpop.f32.mrb[0].mxu0
        %v858 = vadd.f32 0.0, %v857
        %v859 = vpop.f32.mrb[0].mxu0
        %v860 = vadd.f32 0.0, %v859
        %861 = vdwg.mxu0
        %v862 = vld [vmem:[%s382] sm:$0xf]
        %vm863 = vcmp.gt.f32.partialorder %v862, 0.0
        %s864 = smul.u32 %s24, 64
        %v865 = vlaneseq
        %v866 = vshrl.u32 %v865, 7
        %v867 = vadd.s32 %v866, 8
        %v868 = vadd.s32 %v866, 16
        %v869 = vadd.s32 %v866, 24
        %v870 = vadd.s32 %v866, 32
        %v871 = vadd.s32 %v866, 40
        %v872 = vadd.s32 %v866, 48
        %v873 = vadd.s32 %v866, 56
        %v874 = vstv %s864
        %v875 = vadd.s32 %v874, %v866
        %v876 = vadd.s32 %v874, %v867
        %v877 = vadd.s32 %v874, %v868
        %v878 = vadd.s32 %v874, %v869
        %v879 = vadd.s32 %v874, %v870
        %v880 = vadd.s32 %v874, %v871
        %v881 = vadd.s32 %v874, %v872
        %v882 = vadd.s32 %v874, %v873
        %s883 = smul.u32 %s25, 512
        %v884 = vlaneseq
        %v885 = vand.u32 %v884, 127
        %v886 = vadd.s32 %v885, 128
        %v887 = vadd.s32 %v885, 256
        %v888 = vadd.s32 %v885, 384
        %v889 = vstv %s883
        %v890 = vadd.s32 %v889, %v885
        %v891 = vadd.s32 %v889, %v886
        %v892 = vadd.s32 %v889, %v887
        %v893 = vadd.s32 %v889, %v888
        %vm894 = vcmp.ne.s32.totalorder %v875, %v890
        %vm895 = vcmp.ne.s32.totalorder %v875, %v891
        %vm896 = vcmp.ne.s32.totalorder %v875, %v892
        %vm897 = vcmp.ne.s32.totalorder %v875, %v893
        %vm898 = vcmp.ne.s32.totalorder %v876, %v890
        %vm899 = vcmp.ne.s32.totalorder %v876, %v891
        %vm900 = vcmp.ne.s32.totalorder %v876, %v892
        %vm901 = vcmp.ne.s32.totalorder %v876, %v893
        %vm902 = vcmp.ne.s32.totalorder %v877, %v890
        %vm903 = vcmp.ne.s32.totalorder %v877, %v891
        %vm904 = vcmp.ne.s32.totalorder %v877, %v892
        %vm905 = vcmp.ne.s32.totalorder %v877, %v893
        %vm906 = vcmp.ne.s32.totalorder %v878, %v890
        %vm907 = vcmp.ne.s32.totalorder %v878, %v891
        %vm908 = vcmp.ne.s32.totalorder %v878, %v892
        %vm909 = vcmp.ne.s32.totalorder %v878, %v893
        %vm910 = vcmp.ne.s32.totalorder %v879, %v890
        %vm911 = vcmp.ne.s32.totalorder %v879, %v891
        %vm912 = vcmp.ne.s32.totalorder %v879, %v892
        %vm913 = vcmp.ne.s32.totalorder %v879, %v893
        %vm914 = vcmp.ne.s32.totalorder %v880, %v890
        %vm915 = vcmp.ne.s32.totalorder %v880, %v891
        %vm916 = vcmp.ne.s32.totalorder %v880, %v892
        %vm917 = vcmp.ne.s32.totalorder %v880, %v893
        %vm918 = vcmp.ne.s32.totalorder %v881, %v890
        %vm919 = vcmp.ne.s32.totalorder %v881, %v891
        %vm920 = vcmp.ne.s32.totalorder %v881, %v892
        %vm921 = vcmp.ne.s32.totalorder %v881, %v893
        %vm922 = vcmp.ne.s32.totalorder %v882, %v890
        %vm923 = vcmp.ne.s32.totalorder %v882, %v891
        %vm924 = vcmp.ne.s32.totalorder %v882, %v892
        %vm925 = vcmp.ne.s32.totalorder %v882, %v893
        %v926 = vsel %vm863, 1, 0
        %v927 = vlaneseq
        %v928 = vshrl.u32 %v927, 7
        %v929 = vsub.s32 0, %v928
        %v930 = vrot.slane %v926, %v929
        %v931 = vlaneseq
        %v932 = vshrl.u32 %v931, 7
        %v933 = vsub.s32 1, %v932
        %v934 = vrot.slane %v926, %v933
        %v935 = vlaneseq
        %v936 = vshrl.u32 %v935, 7
        %v937 = vsub.s32 2, %v936
        %v938 = vrot.slane %v926, %v937
        %v939 = vlaneseq
        %v940 = vshrl.u32 %v939, 7
        %v941 = vsub.s32 3, %v940
        %v942 = vrot.slane %v926, %v941
        %vm943 = vcmp.eq.s32.totalorder %v930, 1
        %vm944 = vcmp.eq.s32.totalorder %v934, 1
        %vm945 = vcmp.eq.s32.totalorder %v938, 1
        %vm946 = vcmp.eq.s32.totalorder %v942, 1
        %v947 = vsel %vm943, %v751, -1e+30
        %v948 = vsel %vm944, %v753, -1e+30
        %v949 = vsel %vm945, %v824, -1e+30
        %v950 = vsel %vm946, %v826, -1e+30
        %v951 = vsel %vm943, %v755, -1e+30
        %v952 = vsel %vm944, %v757, -1e+30
        %v953 = vsel %vm945, %v828, -1e+30
        %v954 = vsel %vm946, %v830, -1e+30
        %v955 = vsel %vm943, %v761, -1e+30
        %v956 = vsel %vm944, %v763, -1e+30
        %v957 = vsel %vm945, %v834, -1e+30
        %v958 = vsel %vm946, %v836, -1e+30
        %v959 = vsel %vm943, %v765, -1e+30
        %v960 = vsel %vm944, %v767, -1e+30
        %v961 = vsel %vm945, %v838, -1e+30
        %v962 = vsel %vm946, %v840, -1e+30
        %v963 = vsel %vm943, %v771, -1e+30
        %v964 = vsel %vm944, %v773, -1e+30
        %v965 = vsel %vm945, %v844, -1e+30
        %v966 = vsel %vm946, %v846, -1e+30
        %v967 = vsel %vm943, %v775, -1e+30
        %v968 = vsel %vm944, %v777, -1e+30
        %v969 = vsel %vm945, %v848, -1e+30
        %v970 = vsel %vm946, %v850, -1e+30
        %v971 = vsel %vm943, %v781, -1e+30
        %v972 = vsel %vm944, %v783, -1e+30
        %v973 = vsel %vm945, %v854, -1e+30
        %v974 = vsel %vm946, %v856, -1e+30
        %v975 = vsel %vm943, %v785, -1e+30
        %v976 = vsel %vm944, %v787, -1e+30
        %v977 = vsel %vm945, %v858, -1e+30
        %v978 = vsel %vm946, %v860, -1e+30
        %v979 = vmax.f32 %v947, %v948
        %v980 = vmax.f32 %v979, %v949
        %v981 = vmax.f32 %v980, %v950
        %982 = vmax.xlane.f32.xlu0 %v981
        %v983 = vpop.xlane.xlu0 %982
        %v984 = vmax.f32 %v951, %v952
        %v985 = vmax.f32 %v984, %v953
        %v986 = vmax.f32 %v985, %v954
        %987 = vmax.xlane.f32.xlu0 %v986
        %v988 = vpop.xlane.xlu0 %987
        %v989 = vmax.f32 %v955, %v956
        %v990 = vmax.f32 %v989, %v957
        %v991 = vmax.f32 %v990, %v958
        %992 = vmax.xlane.f32.xlu0 %v991
        %v993 = vpop.xlane.xlu0 %992
        %v994 = vmax.f32 %v959, %v960
        %v995 = vmax.f32 %v994, %v961
        %v996 = vmax.f32 %v995, %v962
        %997 = vmax.xlane.f32.xlu0 %v996
        %v998 = vpop.xlane.xlu0 %997
        %v999 = vmax.f32 %v963, %v964
        %v1000 = vmax.f32 %v999, %v965
        %v1001 = vmax.f32 %v1000, %v966
        %1002 = vmax.xlane.f32.xlu0 %v1001
        %v1003 = vpop.xlane.xlu0 %1002
        %v1004 = vmax.f32 %v967, %v968
        %v1005 = vmax.f32 %v1004, %v969
        %v1006 = vmax.f32 %v1005, %v970
        %1007 = vmax.xlane.f32.xlu0 %v1006
        %v1008 = vpop.xlane.xlu0 %1007
        %v1009 = vmax.f32 %v971, %v972
        %v1010 = vmax.f32 %v1009, %v973
        %v1011 = vmax.f32 %v1010, %v974
        %1012 = vmax.xlane.f32.xlu0 %v1011
        %v1013 = vpop.xlane.xlu0 %1012
        %v1014 = vmax.f32 %v975, %v976
        %v1015 = vmax.f32 %v1014, %v977
        %v1016 = vmax.f32 %v1015, %v978
        %1017 = vmax.xlane.f32.xlu0 %v1016
        %v1018 = vpop.xlane.xlu0 %1017
        %v1019 = vld [vmem:[#allocation2] sm:$0xff]
        %v1020 = vld [vmem:[#allocation2 + $0x8] sm:$0xff]
        %v1021 = vld [vmem:[#allocation2 + $0x10] sm:$0xff]
        %v1022 = vld [vmem:[#allocation2 + $0x18] sm:$0xff]
        %v1023 = vld [vmem:[#allocation2 + $0x20] sm:$0xff]
        %v1024 = vld [vmem:[#allocation2 + $0x28] sm:$0xff]
        %v1025 = vld [vmem:[#allocation2 + $0x30] sm:$0xff]
        %v1026 = vld [vmem:[#allocation2 + $0x38] sm:$0xff]
        %v1027 = vmax.f32 %v1019, %v983
        %v1028 = vmax.f32 %v1020, %v988
        %v1029 = vmax.f32 %v1021, %v993
        %v1030 = vmax.f32 %v1022, %v998
        %v1031 = vmax.f32 %v1023, %v1003
        %v1032 = vmax.f32 %v1024, %v1008
        %v1033 = vmax.f32 %v1025, %v1013
        %v1034 = vmax.f32 %v1026, %v1018
        %v1035 = vsub.f32 %v1019, %v1027
        %v1036 = vsub.f32 %v1020, %v1028
        %v1037 = vsub.f32 %v1021, %v1029
        %v1038 = vsub.f32 %v1022, %v1030
        %v1039 = vsub.f32 %v1023, %v1031
        %v1040 = vsub.f32 %v1024, %v1032
        %v1041 = vsub.f32 %v1025, %v1033
        %v1042 = vsub.f32 %v1026, %v1034
        %v1043 = vmul.f32 %v1035, 1.442695
        %v1044 = vpow.pop %v1043
        %v1045 = vmul.f32 %v1036, 1.442695
        %v1046 = vpow.pop %v1045
        %v1047 = vmul.f32 %v1037, 1.442695
        %v1048 = vpow.pop %v1047
        %v1049 = vmul.f32 %v1038, 1.442695
        %v1050 = vpow.pop %v1049
        %v1051 = vmul.f32 %v1039, 1.442695
        %v1052 = vpow.pop %v1051
        %v1053 = vmul.f32 %v1040, 1.442695
        %v1054 = vpow.pop %v1053
        %v1055 = vmul.f32 %v1041, 1.442695
        %v1056 = vpow.pop %v1055
        %v1057 = vmul.f32 %v1042, 1.442695
        %v1058 = vpow.pop %v1057
        %1060 = vset.pattern.permute.xlu0 0
        %1061 = vperm.xlu0 %1060, %v1027
        %v1062 = vpop.permute.xlu0 %1061
        %1065 = vset.pattern.permute.xlu0 0
        %1066 = vperm.xlu0 %1065, %v1028
        %v1067 = vpop.permute.xlu0 %1066
        %1070 = vset.pattern.permute.xlu0 0
        %1071 = vperm.xlu0 %1070, %v1029
        %v1072 = vpop.permute.xlu0 %1071
        %1075 = vset.pattern.permute.xlu0 0
        %1076 = vperm.xlu0 %1075, %v1030
        %v1077 = vpop.permute.xlu0 %1076
        %1080 = vset.pattern.permute.xlu0 0
        %1081 = vperm.xlu0 %1080, %v1031
        %v1082 = vpop.permute.xlu0 %1081
        %1085 = vset.pattern.permute.xlu0 0
        %1086 = vperm.xlu0 %1085, %v1032
        %v1087 = vpop.permute.xlu0 %1086
        %1090 = vset.pattern.permute.xlu0 0
        %1091 = vperm.xlu0 %1090, %v1033
        %v1092 = vpop.permute.xlu0 %1091
        %1095 = vset.pattern.permute.xlu0 0
        %1096 = vperm.xlu0 %1095, %v1034
        %v1097 = vpop.permute.xlu0 %1096
        %v1099 = vsub.f32 %v947, %v1062
        %v1100 = vsub.f32 %v948, %v1062
        %v1101 = vsub.f32 %v949, %v1062
        %v1102 = vsub.f32 %v950, %v1062
        %v1103 = vsub.f32 %v951, %v1067
        %v1104 = vsub.f32 %v952, %v1067
        %v1105 = vsub.f32 %v953, %v1067
        %v1106 = vsub.f32 %v954, %v1067
        %v1107 = vsub.f32 %v955, %v1072
        %v1108 = vsub.f32 %v956, %v1072
        %v1109 = vsub.f32 %v957, %v1072
        %v1110 = vsub.f32 %v958, %v1072
        %v1111 = vsub.f32 %v959, %v1077
        %v1112 = vsub.f32 %v960, %v1077
        %v1113 = vsub.f32 %v961, %v1077
        %v1114 = vsub.f32 %v962, %v1077
        %v1115 = vsub.f32 %v963, %v1082
        %v1116 = vsub.f32 %v964, %v1082
        %v1117 = vsub.f32 %v965, %v1082
        %v1118 = vsub.f32 %v966, %v1082
        %v1119 = vsub.f32 %v967, %v1087
        %v1120 = vsub.f32 %v968, %v1087
        %v1121 = vsub.f32 %v969, %v1087
        %v1122 = vsub.f32 %v970, %v1087
        %v1123 = vsub.f32 %v971, %v1092
        %v1124 = vsub.f32 %v972, %v1092
        %v1125 = vsub.f32 %v973, %v1092
        %v1126 = vsub.f32 %v974, %v1092
        %v1127 = vsub.f32 %v975, %v1097
        %v1128 = vsub.f32 %v976, %v1097
        %v1129 = vsub.f32 %v977, %v1097
        %v1130 = vsub.f32 %v978, %v1097
        %v1131 = vmul.f32 %v1099, 1.442695
        %v1132 = vpow.pop %v1131
        %v1133 = vmul.f32 %v1100, 1.442695
        %v1134 = vpow.pop %v1133
        %v1135 = vmul.f32 %v1101, 1.442695
        %v1136 = vpow.pop %v1135
        %v1137 = vmul.f32 %v1102, 1.442695
        %v1138 = vpow.pop %v1137
        %v1139 = vmul.f32 %v1103, 1.442695
        %v1140 = vpow.pop %v1139
        %v1141 = vmul.f32 %v1104, 1.442695
        %v1142 = vpow.pop %v1141
        %v1143 = vmul.f32 %v1105, 1.442695
        %v1144 = vpow.pop %v1143
        %v1145 = vmul.f32 %v1106, 1.442695
        %v1146 = vpow.pop %v1145
        %v1147 = vmul.f32 %v1107, 1.442695
        %v1148 = vpow.pop %v1147
        %v1149 = vmul.f32 %v1108, 1.442695
        %v1150 = vpow.pop %v1149
        %v1151 = vmul.f32 %v1109, 1.442695
        %v1152 = vpow.pop %v1151
        %v1153 = vmul.f32 %v1110, 1.442695
        %v1154 = vpow.pop %v1153
        %v1155 = vmul.f32 %v1111, 1.442695
        %v1156 = vpow.pop %v1155
        %v1157 = vmul.f32 %v1112, 1.442695
        %v1158 = vpow.pop %v1157
        %v1159 = vmul.f32 %v1113, 1.442695
        %v1160 = vpow.pop %v1159
        %v1161 = vmul.f32 %v1114, 1.442695
        %v1162 = vpow.pop %v1161
        %v1163 = vmul.f32 %v1115, 1.442695
        %v1164 = vpow.pop %v1163
        %v1165 = vmul.f32 %v1116, 1.442695
        %v1166 = vpow.pop %v1165
        %v1167 = vmul.f32 %v1117, 1.442695
        %v1168 = vpow.pop %v1167
        %v1169 = vmul.f32 %v1118, 1.442695
        %v1170 = vpow.pop %v1169
        %v1171 = vmul.f32 %v1119, 1.442695
        %v1172 = vpow.pop %v1171
        %v1173 = vmul.f32 %v1120, 1.442695
        %v1174 = vpow.pop %v1173
        %v1175 = vmul.f32 %v1121, 1.442695
        %v1176 = vpow.pop %v1175
        %v1177 = vmul.f32 %v1122, 1.442695
        %v1178 = vpow.pop %v1177
        %v1179 = vmul.f32 %v1123, 1.442695
        %v1180 = vpow.pop %v1179
        %v1181 = vmul.f32 %v1124, 1.442695
        %v1182 = vpow.pop %v1181
        %v1183 = vmul.f32 %v1125, 1.442695
        %v1184 = vpow.pop %v1183
        %v1185 = vmul.f32 %v1126, 1.442695
        %v1186 = vpow.pop %v1185
        %v1187 = vmul.f32 %v1127, 1.442695
        %v1188 = vpow.pop %v1187
        %v1189 = vmul.f32 %v1128, 1.442695
        %v1190 = vpow.pop %v1189
        %v1191 = vmul.f32 %v1129, 1.442695
        %v1192 = vpow.pop %v1191
        %v1193 = vmul.f32 %v1130, 1.442695
        %v1194 = vpow.pop %v1193
        %v1195 = vsel %vm894, %v1132, 0.0
        %v1196 = vsel %vm895, %v1134, 0.0
        %v1197 = vsel %vm896, %v1136, 0.0
        %v1198 = vsel %vm897, %v1138, 0.0
        %v1199 = vsel %vm898, %v1140, 0.0
        %v1200 = vsel %vm899, %v1142, 0.0
        %v1201 = vsel %vm900, %v1144, 0.0
        %v1202 = vsel %vm901, %v1146, 0.0
        %v1203 = vsel %vm902, %v1148, 0.0
        %v1204 = vsel %vm903, %v1150, 0.0
        %v1205 = vsel %vm904, %v1152, 0.0
        %v1206 = vsel %vm905, %v1154, 0.0
        %v1207 = vsel %vm906, %v1156, 0.0
        %v1208 = vsel %vm907, %v1158, 0.0
        %v1209 = vsel %vm908, %v1160, 0.0
        %v1210 = vsel %vm909, %v1162, 0.0
        %v1211 = vsel %vm910, %v1164, 0.0
        %v1212 = vsel %vm911, %v1166, 0.0
        %v1213 = vsel %vm912, %v1168, 0.0
        %v1214 = vsel %vm913, %v1170, 0.0
        %v1215 = vsel %vm914, %v1172, 0.0
        %v1216 = vsel %vm915, %v1174, 0.0
        %v1217 = vsel %vm916, %v1176, 0.0
        %v1218 = vsel %vm917, %v1178, 0.0
        %v1219 = vsel %vm918, %v1180, 0.0
        %v1220 = vsel %vm919, %v1182, 0.0
        %v1221 = vsel %vm920, %v1184, 0.0
        %v1222 = vsel %vm921, %v1186, 0.0
        %v1223 = vsel %vm922, %v1188, 0.0
        %v1224 = vsel %vm923, %v1190, 0.0
        %v1225 = vsel %vm924, %v1192, 0.0
        %v1226 = vsel %vm925, %v1194, 0.0
        %v1227 = vld [vmem:[#allocation3] sm:$0xff]
        %v1228 = vld [vmem:[#allocation3 + $0x8] sm:$0xff]
        %v1229 = vld [vmem:[#allocation3 + $0x10] sm:$0xff]
        %v1230 = vld [vmem:[#allocation3 + $0x18] sm:$0xff]
        %v1231 = vld [vmem:[#allocation3 + $0x20] sm:$0xff]
        %v1232 = vld [vmem:[#allocation3 + $0x28] sm:$0xff]
        %v1233 = vld [vmem:[#allocation3 + $0x30] sm:$0xff]
        %v1234 = vld [vmem:[#allocation3 + $0x38] sm:$0xff]
        %v1235 = vmul.f32 %v1044, %v1227
        %v1236 = vmul.f32 %v1046, %v1228
        %v1237 = vmul.f32 %v1048, %v1229
        %v1238 = vmul.f32 %v1050, %v1230
        %v1239 = vmul.f32 %v1052, %v1231
        %v1240 = vmul.f32 %v1054, %v1232
        %v1241 = vmul.f32 %v1056, %v1233
        %v1242 = vmul.f32 %v1058, %v1234
        %v1243 = vadd.f32 %v1195, %v1196
        %v1244 = vadd.f32 %v1243, %v1197
        %v1245 = vadd.f32 %v1244, %v1198
        %1246 = vadd.xlane.f32.xlu0 %v1245
        %v1247 = vpop.xlane.xlu0 %1246
        %v1248 = vadd.f32 %v1199, %v1200
        %v1249 = vadd.f32 %v1248, %v1201
        %v1250 = vadd.f32 %v1249, %v1202
        %1251 = vadd.xlane.f32.xlu0 %v1250
        %v1252 = vpop.xlane.xlu0 %1251
        %v1253 = vadd.f32 %v1203, %v1204
        %v1254 = vadd.f32 %v1253, %v1205
        %v1255 = vadd.f32 %v1254, %v1206
        %1256 = vadd.xlane.f32.xlu0 %v1255
        %v1257 = vpop.xlane.xlu0 %1256
        %v1258 = vadd.f32 %v1207, %v1208
        %v1259 = vadd.f32 %v1258, %v1209
        %v1260 = vadd.f32 %v1259, %v1210
        %1261 = vadd.xlane.f32.xlu0 %v1260
        %v1262 = vpop.xlane.xlu0 %1261
        %v1263 = vadd.f32 %v1211, %v1212
        %v1264 = vadd.f32 %v1263, %v1213
        %v1265 = vadd.f32 %v1264, %v1214
        %1266 = vadd.xlane.f32.xlu0 %v1265
        %v1267 = vpop.xlane.xlu0 %1266
        %v1268 = vadd.f32 %v1215, %v1216
        %v1269 = vadd.f32 %v1268, %v1217
        %v1270 = vadd.f32 %v1269, %v1218
        %1271 = vadd.xlane.f32.xlu0 %v1270
        %v1272 = vpop.xlane.xlu0 %1271
        %v1273 = vadd.f32 %v1219, %v1220
        %v1274 = vadd.f32 %v1273, %v1221
        %v1275 = vadd.f32 %v1274, %v1222
        %1276 = vadd.xlane.f32.xlu0 %v1275
        %v1277 = vpop.xlane.xlu0 %1276
        %v1278 = vadd.f32 %v1223, %v1224
        %v1279 = vadd.f32 %v1278, %v1225
        %v1280 = vadd.f32 %v1279, %v1226
        %1281 = vadd.xlane.f32.xlu0 %v1280
        %v1282 = vpop.xlane.xlu0 %1281
        %v1283 = vadd.f32 %v1235, %v1247
        %v1284 = vadd.f32 %v1236, %v1252
        %v1285 = vadd.f32 %v1237, %v1257
        %v1286 = vadd.f32 %v1238, %v1262
        %v1287 = vadd.f32 %v1239, %v1267
        %v1288 = vadd.f32 %v1240, %v1272
        %v1289 = vadd.f32 %v1241, %v1277
        %v1290 = vadd.f32 %v1242, %v1282
        %vm1291 = vcmask 7168
        %1292 = vst.msk [vmem:[#allocation3] sm:$0xff] %vm1291, %v1283
        %1293 = vst.msk [vmem:[#allocation3 + $0x8] sm:$0xff] %vm1291, %v1284
        %1294 = vst.msk [vmem:[#allocation3 + $0x10] sm:$0xff] %vm1291, %v1285
        %1295 = vst.msk [vmem:[#allocation3 + $0x18] sm:$0xff] %vm1291, %v1286
        %1296 = vst.msk [vmem:[#allocation3 + $0x20] sm:$0xff] %vm1291, %v1287
        %1297 = vst.msk [vmem:[#allocation3 + $0x28] sm:$0xff] %vm1291, %v1288
        %1298 = vst.msk [vmem:[#allocation3 + $0x30] sm:$0xff] %vm1291, %v1289
        %1299 = vst.msk [vmem:[#allocation3 + $0x38] sm:$0xff] %vm1291, %v1290
        %1300 = vst.msk [vmem:[#allocation2] sm:$0xff] %vm1291, %v1027
        %1301 = vst.msk [vmem:[#allocation2 + $0x8] sm:$0xff] %vm1291, %v1028
        %1302 = vst.msk [vmem:[#allocation2 + $0x10] sm:$0xff] %vm1291, %v1029
        %1303 = vst.msk [vmem:[#allocation2 + $0x18] sm:$0xff] %vm1291, %v1030
        %1304 = vst.msk [vmem:[#allocation2 + $0x20] sm:$0xff] %vm1291, %v1031
        %1305 = vst.msk [vmem:[#allocation2 + $0x28] sm:$0xff] %vm1291, %v1032
        %1306 = vst.msk [vmem:[#allocation2 + $0x30] sm:$0xff] %vm1291, %v1033
        %1307 = vst.msk [vmem:[#allocation2 + $0x38] sm:$0xff] %vm1291, %v1034
        %v1308 = vld [vmem:[%s366] sm:$0xff]
        %v1309 = vld [vmem:[%s366 + $0x8] sm:$0xff]
        %v1310 = vld [vmem:[%s366 + $0x10] sm:$0xff]
        %v1311 = vld [vmem:[%s366 + $0x18] sm:$0xff]
        %v1312 = vld [vmem:[%s366 + $0x20] sm:$0xff]
        %v1313 = vld [vmem:[%s366 + $0x28] sm:$0xff]
        %v1314 = vld [vmem:[%s366 + $0x30] sm:$0xff]
        %v1315 = vld [vmem:[%s366 + $0x38] sm:$0xff]
        %v1316 = vld [vmem:[%s371] sm:$0xf]
        %1317 = vset.pattern.permute.xlu0 0
        %1318 = vperm.xlu0 %1317, %v1308
        %v1319 = vpop.permute.xlu0 %1318
        %1320 = vset.pattern.permute.xlu0 0
        %1321 = vperm.xlu0 %1320, %v1309
        %v1322 = vpop.permute.xlu0 %1321
        %1323 = vset.pattern.permute.xlu0 0
        %1324 = vperm.xlu0 %1323, %v1310
        %v1325 = vpop.permute.xlu0 %1324
        %1326 = vset.pattern.permute.xlu0 0
        %1327 = vperm.xlu0 %1326, %v1311
        %v1328 = vpop.permute.xlu0 %1327
        %1329 = vset.pattern.permute.xlu0 0
        %1330 = vperm.xlu0 %1329, %v1312
        %v1331 = vpop.permute.xlu0 %1330
        %1332 = vset.pattern.permute.xlu0 0
        %1333 = vperm.xlu0 %1332, %v1313
        %v1334 = vpop.permute.xlu0 %1333
        %1335 = vset.pattern.permute.xlu0 0
        %1336 = vperm.xlu0 %1335, %v1314
        %v1337 = vpop.permute.xlu0 %1336
        %1338 = vset.pattern.permute.xlu0 0
        %1339 = vperm.xlu0 %1338, %v1315
        %v1340 = vpop.permute.xlu0 %1339
        %v1341 = vlaneseq
        %v1342 = vshrl.u32 %v1341, 7
        %v1343 = vsub.s32 0, %v1342
        %v1344 = vrot.slane %v1316, %v1343
        %v1345 = vlaneseq
        %v1346 = vshrl.u32 %v1345, 7
        %v1347 = vsub.s32 1, %v1346
        %v1348 = vrot.slane %v1316, %v1347
        %v1349 = vlaneseq
        %v1350 = vshrl.u32 %v1349, 7
        %v1351 = vsub.s32 2, %v1350
        %v1352 = vrot.slane %v1316, %v1351
        %v1353 = vlaneseq
        %v1354 = vshrl.u32 %v1353, 7
        %v1355 = vsub.s32 3, %v1354
        %v1356 = vrot.slane %v1316, %v1355
        %vm1357 = vcmp.eq.s32.totalorder %v1319, %v1344
        %vm1358 = vcmp.eq.s32.totalorder %v1319, %v1348
        %vm1359 = vcmp.eq.s32.totalorder %v1319, %v1352
        %vm1360 = vcmp.eq.s32.totalorder %v1319, %v1356
        %vm1361 = vcmp.eq.s32.totalorder %v1322, %v1344
        %vm1362 = vcmp.eq.s32.totalorder %v1322, %v1348
        %vm1363 = vcmp.eq.s32.totalorder %v1322, %v1352
        %vm1364 = vcmp.eq.s32.totalorder %v1322, %v1356
        %vm1365 = vcmp.eq.s32.totalorder %v1325, %v1344
        %vm1366 = vcmp.eq.s32.totalorder %v1325, %v1348
        %vm1367 = vcmp.eq.s32.totalorder %v1325, %v1352
        %vm1368 = vcmp.eq.s32.totalorder %v1325, %v1356
        %vm1369 = vcmp.eq.s32.totalorder %v1328, %v1344
        %vm1370 = vcmp.eq.s32.totalorder %v1328, %v1348
        %vm1371 = vcmp.eq.s32.totalorder %v1328, %v1352
        %vm1372 = vcmp.eq.s32.totalorder %v1328, %v1356
        %vm1373 = vcmp.eq.s32.totalorder %v1331, %v1344
        %vm1374 = vcmp.eq.s32.totalorder %v1331, %v1348
        %vm1375 = vcmp.eq.s32.totalorder %v1331, %v1352
        %vm1376 = vcmp.eq.s32.totalorder %v1331, %v1356
        %vm1377 = vcmp.eq.s32.totalorder %v1334, %v1344
        %vm1378 = vcmp.eq.s32.totalorder %v1334, %v1348
        %vm1379 = vcmp.eq.s32.totalorder %v1334, %v1352
        %vm1380 = vcmp.eq.s32.totalorder %v1334, %v1356
        %vm1381 = vcmp.eq.s32.totalorder %v1337, %v1344
        %vm1382 = vcmp.eq.s32.totalorder %v1337, %v1348
        %vm1383 = vcmp.eq.s32.totalorder %v1337, %v1352
        %vm1384 = vcmp.eq.s32.totalorder %v1337, %v1356
        %vm1385 = vcmp.eq.s32.totalorder %v1340, %v1344
        %vm1386 = vcmp.eq.s32.totalorder %v1340, %v1348
        %vm1387 = vcmp.eq.s32.totalorder %v1340, %v1352
        %vm1388 = vcmp.eq.s32.totalorder %v1340, %v1356
        %vm1389 = vmand %vm1357, %vm943
        %vm1390 = vmand %vm1358, %vm944
        %vm1391 = vmand %vm1359, %vm945
        %vm1392 = vmand %vm1360, %vm946
        %vm1393 = vmand %vm1361, %vm943
        %vm1394 = vmand %vm1362, %vm944
        %vm1395 = vmand %vm1363, %vm945
        %vm1396 = vmand %vm1364, %vm946
        %vm1397 = vmand %vm1365, %vm943
        %vm1398 = vmand %vm1366, %vm944
        %vm1399 = vmand %vm1367, %vm945
        %vm1400 = vmand %vm1368, %vm946
        %vm1401 = vmand %vm1369, %vm943
        %vm1402 = vmand %vm1370, %vm944
        %vm1403 = vmand %vm1371, %vm945
        %vm1404 = vmand %vm1372, %vm946
        %vm1405 = vmand %vm1373, %vm943
        %vm1406 = vmand %vm1374, %vm944
        %vm1407 = vmand %vm1375, %vm945
        %vm1408 = vmand %vm1376, %vm946
        %vm1409 = vmand %vm1377, %vm943
        %vm1410 = vmand %vm1378, %vm944
        %vm1411 = vmand %vm1379, %vm945
        %vm1412 = vmand %vm1380, %vm946
        %vm1413 = vmand %vm1381, %vm943
        %vm1414 = vmand %vm1382, %vm944
        %vm1415 = vmand %vm1383, %vm945
        %vm1416 = vmand %vm1384, %vm946
        %vm1417 = vmand %vm1385, %vm943
        %vm1418 = vmand %vm1386, %vm944
        %vm1419 = vmand %vm1387, %vm945
        %vm1420 = vmand %vm1388, %vm946
        %vm1421 = vmand %vm1389, %vm894
        %vm1422 = vmand %vm1390, %vm895
        %vm1423 = vmand %vm1391, %vm896
        %vm1424 = vmand %vm1392, %vm897
        %vm1425 = vmand %vm1393, %vm898
        %vm1426 = vmand %vm1394, %vm899
        %vm1427 = vmand %vm1395, %vm900
        %vm1428 = vmand %vm1396, %vm901
        %vm1429 = vmand %vm1397, %vm902
        %vm1430 = vmand %vm1398, %vm903
        %vm1431 = vmand %vm1399, %vm904
        %vm1432 = vmand %vm1400, %vm905
        %vm1433 = vmand %vm1401, %vm906
        %vm1434 = vmand %vm1402, %vm907
        %vm1435 = vmand %vm1403, %vm908
        %vm1436 = vmand %vm1404, %vm909
        %vm1437 = vmand %vm1405, %vm910
        %vm1438 = vmand %vm1406, %vm911
        %vm1439 = vmand %vm1407, %vm912
        %vm1440 = vmand %vm1408, %vm913
        %vm1441 = vmand %vm1409, %vm914
        %vm1442 = vmand %vm1410, %vm915
        %vm1443 = vmand %vm1411, %vm916
        %vm1444 = vmand %vm1412, %vm917
        %vm1445 = vmand %vm1413, %vm918
        %vm1446 = vmand %vm1414, %vm919
        %vm1447 = vmand %vm1415, %vm920
        %vm1448 = vmand %vm1416, %vm921
        %vm1449 = vmand %vm1417, %vm922
        %vm1450 = vmand %vm1418, %vm923
        %vm1451 = vmand %vm1419, %vm924
        %vm1452 = vmand %vm1420, %vm925
        %v1453 = vld [vmem:[#allocation4] sm:$0xff]
        %v1454 = vld [vmem:[#allocation4 + $0x8] sm:$0xff]
        %v1455 = vld [vmem:[#allocation4 + $0x10] sm:$0xff]
        %v1456 = vld [vmem:[#allocation4 + $0x18] sm:$0xff]
        %v1457 = vld [vmem:[#allocation4 + $0x20] sm:$0xff]
        %v1458 = vld [vmem:[#allocation4 + $0x28] sm:$0xff]
        %v1459 = vld [vmem:[#allocation4 + $0x30] sm:$0xff]
        %v1460 = vld [vmem:[#allocation4 + $0x38] sm:$0xff]
        %v1461 = vsel %vm1421, %v751, 0.0
        %v1462 = vsel %vm1422, %v753, 0.0
        %v1463 = vsel %vm1423, %v824, 0.0
        %v1464 = vsel %vm1424, %v826, 0.0
        %v1465 = vsel %vm1425, %v755, 0.0
        %v1466 = vsel %vm1426, %v757, 0.0
        %v1467 = vsel %vm1427, %v828, 0.0
        %v1468 = vsel %vm1428, %v830, 0.0
        %v1469 = vsel %vm1429, %v761, 0.0
        %v1470 = vsel %vm1430, %v763, 0.0
        %v1471 = vsel %vm1431, %v834, 0.0
        %v1472 = vsel %vm1432, %v836, 0.0
        %v1473 = vsel %vm1433, %v765, 0.0
        %v1474 = vsel %vm1434, %v767, 0.0
        %v1475 = vsel %vm1435, %v838, 0.0
        %v1476 = vsel %vm1436, %v840, 0.0
        %v1477 = vsel %vm1437, %v771, 0.0
        %v1478 = vsel %vm1438, %v773, 0.0
        %v1479 = vsel %vm1439, %v844, 0.0
        %v1480 = vsel %vm1440, %v846, 0.0
        %v1481 = vsel %vm1441, %v775, 0.0
        %v1482 = vsel %vm1442, %v777, 0.0
        %v1483 = vsel %vm1443, %v848, 0.0
        %v1484 = vsel %vm1444, %v850, 0.0
        %v1485 = vsel %vm1445, %v781, 0.0
        %v1486 = vsel %vm1446, %v783, 0.0
        %v1487 = vsel %vm1447, %v854, 0.0
        %v1488 = vsel %vm1448, %v856, 0.0
        %v1489 = vsel %vm1449, %v785, 0.0
        %v1490 = vsel %vm1450, %v787, 0.0
        %v1491 = vsel %vm1451, %v858, 0.0
        %v1492 = vsel %vm1452, %v860, 0.0
        %v1493 = vadd.f32 %v1461, %v1462
        %v1494 = vadd.f32 %v1493, %v1463
        %v1495 = vadd.f32 %v1494, %v1464
        %1496 = vadd.xlane.f32.xlu0 %v1495
        %v1497 = vpop.xlane.xlu0 %1496
        %v1498 = vadd.f32 %v1465, %v1466
        %v1499 = vadd.f32 %v1498, %v1467
        %v1500 = vadd.f32 %v1499, %v1468
        %1501 = vadd.xlane.f32.xlu0 %v1500
        %v1502 = vpop.xlane.xlu0 %1501
        %v1503 = vadd.f32 %v1469, %v1470
        %v1504 = vadd.f32 %v1503, %v1471
        %v1505 = vadd.f32 %v1504, %v1472
        %1506 = vadd.xlane.f32.xlu0 %v1505
        %v1507 = vpop.xlane.xlu0 %1506
        %v1508 = vadd.f32 %v1473, %v1474
        %v1509 = vadd.f32 %v1508, %v1475
        %v1510 = vadd.f32 %v1509, %v1476
        %1511 = vadd.xlane.f32.xlu0 %v1510
        %v1512 = vpop.xlane.xlu0 %1511
        %v1513 = vadd.f32 %v1477, %v1478
        %v1514 = vadd.f32 %v1513, %v1479
        %v1515 = vadd.f32 %v1514, %v1480
        %1516 = vadd.xlane.f32.xlu0 %v1515
        %v1517 = vpop.xlane.xlu0 %1516
        %v1518 = vadd.f32 %v1481, %v1482
        %v1519 = vadd.f32 %v1518, %v1483
        %v1520 = vadd.f32 %v1519, %v1484
        %1521 = vadd.xlane.f32.xlu0 %v1520
        %v1522 = vpop.xlane.xlu0 %1521
        %v1523 = vadd.f32 %v1485, %v1486
        %v1524 = vadd.f32 %v1523, %v1487
        %v1525 = vadd.f32 %v1524, %v1488
        %1526 = vadd.xlane.f32.xlu0 %v1525
        %v1527 = vpop.xlane.xlu0 %1526
        %v1528 = vadd.f32 %v1489, %v1490
        %v1529 = vadd.f32 %v1528, %v1491
        %v1530 = vadd.f32 %v1529, %v1492
        %1531 = vadd.xlane.f32.xlu0 %v1530
        %v1532 = vpop.xlane.xlu0 %1531
        %v1533 = vadd.f32 %v1453, %v1497
        %v1534 = vadd.f32 %v1454, %v1502
        %v1535 = vadd.f32 %v1455, %v1507
        %v1536 = vadd.f32 %v1456, %v1512
        %v1537 = vadd.f32 %v1457, %v1517
        %v1538 = vadd.f32 %v1458, %v1522
        %v1539 = vadd.f32 %v1459, %v1527
        %v1540 = vadd.f32 %v1460, %v1532
        %1541 = vst.msk [vmem:[#allocation4] sm:$0xff] %vm1291, %v1533
        %1542 = vst.msk [vmem:[#allocation4 + $0x8] sm:$0xff] %vm1291, %v1534
        %1543 = vst.msk [vmem:[#allocation4 + $0x10] sm:$0xff] %vm1291, %v1535
        %1544 = vst.msk [vmem:[#allocation4 + $0x18] sm:$0xff] %vm1291, %v1536
        %1545 = vst.msk [vmem:[#allocation4 + $0x20] sm:$0xff] %vm1291, %v1537
        %1546 = vst.msk [vmem:[#allocation4 + $0x28] sm:$0xff] %vm1291, %v1538
        %1547 = vst.msk [vmem:[#allocation4 + $0x30] sm:$0xff] %vm1291, %v1539
        %1548 = vst.msk [vmem:[#allocation4 + $0x38] sm:$0xff] %vm1291, %v1540
        %v1549 = vld [vmem:[#allocation5] sm:$0xff]
        %v1550 = vld [vmem:[#allocation5 + $0x8] sm:$0xff]
        %v1551 = vld [vmem:[#allocation5 + $0x10] sm:$0xff]
        %v1552 = vld [vmem:[#allocation5 + $0x18] sm:$0xff]
        %v1553 = vld [vmem:[#allocation5 + $0x20] sm:$0xff]
        %v1554 = vld [vmem:[#allocation5 + $0x28] sm:$0xff]
        %v1555 = vld [vmem:[#allocation5 + $0x30] sm:$0xff]
        %v1556 = vld [vmem:[#allocation5 + $0x38] sm:$0xff]
        %v1557 = vsel %vm1421, 1, 0
        %v1558 = vsel %vm1422, 1, 0
        %v1559 = vsel %vm1423, 1, 0
        %v1560 = vsel %vm1424, 1, 0
        %v1561 = vsel %vm1425, 1, 0
        %v1562 = vsel %vm1426, 1, 0
        %v1563 = vsel %vm1427, 1, 0
        %v1564 = vsel %vm1428, 1, 0
        %v1565 = vsel %vm1429, 1, 0
        %v1566 = vsel %vm1430, 1, 0
        %v1567 = vsel %vm1431, 1, 0
        %v1568 = vsel %vm1432, 1, 0
        %v1569 = vsel %vm1433, 1, 0
        %v1570 = vsel %vm1434, 1, 0
        %v1571 = vsel %vm1435, 1, 0
        %v1572 = vsel %vm1436, 1, 0
        %v1573 = vsel %vm1437, 1, 0
        %v1574 = vsel %vm1438, 1, 0
        %v1575 = vsel %vm1439, 1, 0
        %v1576 = vsel %vm1440, 1, 0
        %v1577 = vsel %vm1441, 1, 0
        %v1578 = vsel %vm1442, 1, 0
        %v1579 = vsel %vm1443, 1, 0
        %v1580 = vsel %vm1444, 1, 0
        %v1581 = vsel %vm1445, 1, 0
        %v1582 = vsel %vm1446, 1, 0
        %v1583 = vsel %vm1447, 1, 0
        %v1584 = vsel %vm1448, 1, 0
        %v1585 = vsel %vm1449, 1, 0
        %v1586 = vsel %vm1450, 1, 0
        %v1587 = vsel %vm1451, 1, 0
        %v1588 = vsel %vm1452, 1, 0
        %v1589 = vcvt.s32.f32 %v1557
        %v1590 = vcvt.s32.f32 %v1558
        %v1591 = vcvt.s32.f32 %v1559
        %v1592 = vcvt.s32.f32 %v1560
        %v1593 = vcvt.s32.f32 %v1561
        %v1594 = vcvt.s32.f32 %v1562
        %v1595 = vcvt.s32.f32 %v1563
        %v1596 = vcvt.s32.f32 %v1564
        %v1597 = vcvt.s32.f32 %v1565
        %v1598 = vcvt.s32.f32 %v1566
        %v1599 = vcvt.s32.f32 %v1567
        %v1600 = vcvt.s32.f32 %v1568
        %v1601 = vcvt.s32.f32 %v1569
        %v1602 = vcvt.s32.f32 %v1570
        %v1603 = vcvt.s32.f32 %v1571
        %v1604 = vcvt.s32.f32 %v1572
        %v1605 = vcvt.s32.f32 %v1573
        %v1606 = vcvt.s32.f32 %v1574
        %v1607 = vcvt.s32.f32 %v1575
        %v1608 = vcvt.s32.f32 %v1576
        %v1609 = vcvt.s32.f32 %v1577
        %v1610 = vcvt.s32.f32 %v1578
        %v1611 = vcvt.s32.f32 %v1579
        %v1612 = vcvt.s32.f32 %v1580
        %v1613 = vcvt.s32.f32 %v1581
        %v1614 = vcvt.s32.f32 %v1582
        %v1615 = vcvt.s32.f32 %v1583
        %v1616 = vcvt.s32.f32 %v1584
        %v1617 = vcvt.s32.f32 %v1585
        %v1618 = vcvt.s32.f32 %v1586
        %v1619 = vcvt.s32.f32 %v1587
        %v1620 = vcvt.s32.f32 %v1588
        %v1621 = vadd.f32 %v1589, %v1590
        %v1622 = vadd.f32 %v1621, %v1591
        %v1623 = vadd.f32 %v1622, %v1592
        %1624 = vadd.xlane.f32.xlu0 %v1623
        %v1625 = vpop.xlane.xlu0 %1624
        %v1626 = vadd.f32 %v1593, %v1594
        %v1627 = vadd.f32 %v1626, %v1595
        %v1628 = vadd.f32 %v1627, %v1596
        %1629 = vadd.xlane.f32.xlu0 %v1628
        %v1630 = vpop.xlane.xlu0 %1629
        %v1631 = vadd.f32 %v1597, %v1598
        %v1632 = vadd.f32 %v1631, %v1599
        %v1633 = vadd.f32 %v1632, %v1600
        %1634 = vadd.xlane.f32.xlu0 %v1633
        %v1635 = vpop.xlane.xlu0 %1634
        %v1636 = vadd.f32 %v1601, %v1602
        %v1637 = vadd.f32 %v1636, %v1603
        %v1638 = vadd.f32 %v1637, %v1604
        %1639 = vadd.xlane.f32.xlu0 %v1638
        %v1640 = vpop.xlane.xlu0 %1639
        %v1641 = vadd.f32 %v1605, %v1606
        %v1642 = vadd.f32 %v1641, %v1607
        %v1643 = vadd.f32 %v1642, %v1608
        %1644 = vadd.xlane.f32.xlu0 %v1643
        %v1645 = vpop.xlane.xlu0 %1644
        %v1646 = vadd.f32 %v1609, %v1610
        %v1647 = vadd.f32 %v1646, %v1611
        %v1648 = vadd.f32 %v1647, %v1612
        %1649 = vadd.xlane.f32.xlu0 %v1648
        %v1650 = vpop.xlane.xlu0 %1649
        %v1651 = vadd.f32 %v1613, %v1614
        %v1652 = vadd.f32 %v1651, %v1615
        %v1653 = vadd.f32 %v1652, %v1616
        %1654 = vadd.xlane.f32.xlu0 %v1653
        %v1655 = vpop.xlane.xlu0 %1654
        %v1656 = vadd.f32 %v1617, %v1618
        %v1657 = vadd.f32 %v1656, %v1619
        %v1658 = vadd.f32 %v1657, %v1620
        %1659 = vadd.xlane.f32.xlu0 %v1658
        %v1660 = vpop.xlane.xlu0 %1659
        %v1661 = vadd.f32 %v1549, %v1625
        %v1662 = vadd.f32 %v1550, %v1630
        %v1663 = vadd.f32 %v1551, %v1635
        %v1664 = vadd.f32 %v1552, %v1640
        %v1665 = vadd.f32 %v1553, %v1645
        %v1666 = vadd.f32 %v1554, %v1650
        %v1667 = vadd.f32 %v1555, %v1655
        %v1668 = vadd.f32 %v1556, %v1660
        %1669 = vst.msk [vmem:[#allocation5] sm:$0xff] %vm1291, %v1661
        %1670 = vst.msk [vmem:[#allocation5 + $0x8] sm:$0xff] %vm1291, %v1662
        %1671 = vst.msk [vmem:[#allocation5 + $0x10] sm:$0xff] %vm1291, %v1663
        %1672 = vst.msk [vmem:[#allocation5 + $0x18] sm:$0xff] %vm1291, %v1664
        %1673 = vst.msk [vmem:[#allocation5 + $0x20] sm:$0xff] %vm1291, %v1665
        %1674 = vst.msk [vmem:[#allocation5 + $0x28] sm:$0xff] %vm1291, %v1666
        %1675 = vst.msk [vmem:[#allocation5 + $0x30] sm:$0xff] %vm1291, %v1667
        %1676 = vst.msk [vmem:[#allocation5 + $0x38] sm:$0xff] %vm1291, %v1668
        // Predicated region
        $region53: #{tpu_custom_call.1} parent=43 // pred_check
          %p1677 = pneg %p391
        $region54: #{tpu_custom_call.1} parent=43 // pred_check_branch
          %1679 = sbr.rel (%p1677) target = $region56
        $region55: #{tpu_custom_call.1} parent=43 // pred_region
          %v1680 = vld [vmem:[%s377] sm:$0xff]
          %v1681 = vld [vmem:[%s377 + $0x8] sm:$0xff]
          %v1682 = vld [vmem:[%s377 + $0x10] sm:$0xff]
          %v1683 = vld [vmem:[%s377 + $0x18] sm:$0xff]
          %v1684 = vld [vmem:[%s377 + $0x20] sm:$0xff]
          %v1685 = vld [vmem:[%s377 + $0x28] sm:$0xff]
          %v1686 = vld [vmem:[%s377 + $0x30] sm:$0xff]
          %v1687 = vld [vmem:[%s377 + $0x38] sm:$0xff]
          %v1688 = vld [vmem:[#allocation2] sm:$0xff]
          %v1689 = vld [vmem:[#allocation2 + $0x8] sm:$0xff]
          %v1690 = vld [vmem:[#allocation2 + $0x10] sm:$0xff]
          %v1691 = vld [vmem:[#allocation2 + $0x18] sm:$0xff]
          %v1692 = vld [vmem:[#allocation2 + $0x20] sm:$0xff]
          %v1693 = vld [vmem:[#allocation2 + $0x28] sm:$0xff]
          %v1694 = vld [vmem:[#allocation2 + $0x30] sm:$0xff]
          %v1695 = vld [vmem:[#allocation2 + $0x38] sm:$0xff]
          %v1696 = vld [vmem:[#allocation3] sm:$0xff]
          %v1697 = vld [vmem:[#allocation3 + $0x8] sm:$0xff]
          %v1698 = vld [vmem:[#allocation3 + $0x10] sm:$0xff]
          %v1699 = vld [vmem:[#allocation3 + $0x18] sm:$0xff]
          %v1700 = vld [vmem:[#allocation3 + $0x20] sm:$0xff]
          %v1701 = vld [vmem:[#allocation3 + $0x28] sm:$0xff]
          %v1702 = vld [vmem:[#allocation3 + $0x30] sm:$0xff]
          %v1703 = vld [vmem:[#allocation3 + $0x38] sm:$0xff]
          %v1704 = vmax.f32 %v1696, 1e-30
          %v1705 = vmax.f32 %v1697, 1e-30
          %v1706 = vmax.f32 %v1698, 1e-30
          %v1707 = vmax.f32 %v1699, 1e-30
          %v1708 = vmax.f32 %v1700, 1e-30
          %v1709 = vmax.f32 %v1701, 1e-30
          %v1710 = vmax.f32 %v1702, 1e-30
          %v1711 = vmax.f32 %v1703, 1e-30
          %v1712 = vlog2.pop %v1704
          %v1713 = vmul.f32 %v1712, 0.6931472
          %v1714 = vlog2.pop %v1705
          %v1715 = vmul.f32 %v1714, 0.6931472
          %v1716 = vlog2.pop %v1706
          %v1717 = vmul.f32 %v1716, 0.6931472
          %v1718 = vlog2.pop %v1707
          %v1719 = vmul.f32 %v1718, 0.6931472
          %v1720 = vlog2.pop %v1708
          %v1721 = vmul.f32 %v1720, 0.6931472
          %v1722 = vlog2.pop %v1709
          %v1723 = vmul.f32 %v1722, 0.6931472
          %v1724 = vlog2.pop %v1710
          %v1725 = vmul.f32 %v1724, 0.6931472
          %v1726 = vlog2.pop %v1711
          %v1727 = vmul.f32 %v1726, 0.6931472
          %v1728 = vadd.f32 %v1688, %v1713
          %v1729 = vadd.f32 %v1689, %v1715
          %v1730 = vadd.f32 %v1690, %v1717
          %v1731 = vadd.f32 %v1691, %v1719
          %v1732 = vadd.f32 %v1692, %v1721
          %v1733 = vadd.f32 %v1693, %v1723
          %v1734 = vadd.f32 %v1694, %v1725
          %v1735 = vadd.f32 %v1695, %v1727
          %v1736 = vld [vmem:[#allocation4] sm:$0xff]
          %v1737 = vld [vmem:[#allocation4 + $0x8] sm:$0xff]
          %v1738 = vld [vmem:[#allocation4 + $0x10] sm:$0xff]
          %v1739 = vld [vmem:[#allocation4 + $0x18] sm:$0xff]
          %v1740 = vld [vmem:[#allocation4 + $0x20] sm:$0xff]
          %v1741 = vld [vmem:[#allocation4 + $0x28] sm:$0xff]
          %v1742 = vld [vmem:[#allocation4 + $0x30] sm:$0xff]
          %v1743 = vld [vmem:[#allocation4 + $0x38] sm:$0xff]
          %v1744 = vld [vmem:[#allocation5] sm:$0xff]
          %v1745 = vld [vmem:[#allocation5 + $0x8] sm:$0xff]
          %v1746 = vld [vmem:[#allocation5 + $0x10] sm:$0xff]
          %v1747 = vld [vmem:[#allocation5 + $0x18] sm:$0xff]
          %v1748 = vld [vmem:[#allocation5 + $0x20] sm:$0xff]
          %v1749 = vld [vmem:[#allocation5 + $0x28] sm:$0xff]
          %v1750 = vld [vmem:[#allocation5 + $0x30] sm:$0xff]
          %v1751 = vld [vmem:[#allocation5 + $0x38] sm:$0xff]
          %v1752 = vmul.f32 %v1744, %v1728
          %v1753 = vmul.f32 %v1745, %v1729
          %v1754 = vmul.f32 %v1746, %v1730
          %v1755 = vmul.f32 %v1747, %v1731
          %v1756 = vmul.f32 %v1748, %v1732
          %v1757 = vmul.f32 %v1749, %v1733
          %v1758 = vmul.f32 %v1750, %v1734
          %v1759 = vmul.f32 %v1751, %v1735
          %v1760 = vsub.f32 %v1736, %v1752
          %v1761 = vsub.f32 %v1737, %v1753
          %v1762 = vsub.f32 %v1738, %v1754
          %v1763 = vsub.f32 %v1739, %v1755
          %v1764 = vsub.f32 %v1740, %v1756
          %v1765 = vsub.f32 %v1741, %v1757
          %v1766 = vsub.f32 %v1742, %v1758
          %v1767 = vsub.f32 %v1743, %v1759
          %v1768 = vadd.f32 %v1744, 1.0
          %v1769 = vadd.f32 %v1745, 1.0
          %v1770 = vadd.f32 %v1746, 1.0
          %v1771 = vadd.f32 %v1747, 1.0
          %v1772 = vadd.f32 %v1748, 1.0
          %v1773 = vadd.f32 %v1749, 1.0
          %v1774 = vadd.f32 %v1750, 1.0
          %v1775 = vadd.f32 %v1751, 1.0
          %v1776 = vrcp.pop %v1768
          %v1777 = vmul.f32 %v1760, %v1776
          %v1778 = vrcp.pop %v1769
          %v1779 = vmul.f32 %v1761, %v1778
          %v1780 = vrcp.pop %v1770
          %v1781 = vmul.f32 %v1762, %v1780
          %v1782 = vrcp.pop %v1771
          %v1783 = vmul.f32 %v1763, %v1782
          %v1784 = vrcp.pop %v1772
          %v1785 = vmul.f32 %v1764, %v1784
          %v1786 = vrcp.pop %v1773
          %v1787 = vmul.f32 %v1765, %v1786
          %v1788 = vrcp.pop %v1774
          %v1789 = vmul.f32 %v1766, %v1788
          %v1790 = vrcp.pop %v1775
          %v1791 = vmul.f32 %v1767, %v1790
          %v1792 = vsub.f32 0.0, %v1777
          %v1793 = vsub.f32 0.0, %v1779
          %v1794 = vsub.f32 0.0, %v1781
          %v1795 = vsub.f32 0.0, %v1783
          %v1796 = vsub.f32 0.0, %v1785
          %v1797 = vsub.f32 0.0, %v1787
          %v1798 = vsub.f32 0.0, %v1789
          %v1799 = vsub.f32 0.0, %v1791
          %vm1800 = vcmp.gt.f32.partialorder %v1680, 0.0
          %vm1801 = vcmp.gt.f32.partialorder %v1681, 0.0
          %vm1802 = vcmp.gt.f32.partialorder %v1682, 0.0
          %vm1803 = vcmp.gt.f32.partialorder %v1683, 0.0
          %vm1804 = vcmp.gt.f32.partialorder %v1684, 0.0
          %vm1805 = vcmp.gt.f32.partialorder %v1685, 0.0
          %vm1806 = vcmp.gt.f32.partialorder %v1686, 0.0
          %vm1807 = vcmp.gt.f32.partialorder %v1687, 0.0
          %v1808 = vsel %vm1800, %v1792, 0.0
          %v1809 = vsel %vm1801, %v1793, 0.0
          %v1810 = vsel %vm1802, %v1794, 0.0
          %v1811 = vsel %vm1803, %v1795, 0.0
          %v1812 = vsel %vm1804, %v1796, 0.0
          %v1813 = vsel %vm1805, %v1797, 0.0
          %v1814 = vsel %vm1806, %v1798, 0.0
          %v1815 = vsel %vm1807, %v1799, 0.0
          %1816 = vst.msk [vmem:[%s388] sm:$0xff] %vm1291, %v1808
          %1817 = vst.msk [vmem:[%s388 + $0x8] sm:$0xff] %vm1291, %v1809
          %1818 = vst.msk [vmem:[%s388 + $0x10] sm:$0xff] %vm1291, %v1810
          %1819 = vst.msk [vmem:[%s388 + $0x18] sm:$0xff] %vm1291, %v1811
          %1820 = vst.msk [vmem:[%s388 + $0x20] sm:$0xff] %vm1291, %v1812
          %1821 = vst.msk [vmem:[%s388 + $0x28] sm:$0xff] %vm1291, %v1813
          %1822 = vst.msk [vmem:[%s388 + $0x30] sm:$0xff] %vm1291, %v1814
          %1823 = vst.msk [vmem:[%s388 + $0x38] sm:$0xff] %vm1291, %v1815
        $region56: #{tpu_custom_call.1} parent=43 // pred_fallthru
          _
        %s1824 = smul.u32 8, %s24
        %p1825 = scmp.lt.s32.totalorder %s1824, 15
        %s1826 = scalar_select %p1825, %s1824, 15
        %s1827 = smul.addr %s1826, 8
        %s1828 = scalar_lea.vmem %s6, %s1827
        // Predicated region
        $region57: #{tpu_custom_call.1} parent=43 // pred_check
          %p1829 = pneg %p206
        $region58: #{tpu_custom_call.1} parent=43 // pred_check_branch
          %1831 = sbr.rel (%p1829) target = $region60
        $region59: #{tpu_custom_call.1} parent=43 // pred_region
          %s1832 = smul.u32 8, %s24
        $region60: #{tpu_custom_call.1} parent=43 // pred_fallthru
          _
      $region44: #{tpu_custom_call.1} parent=5 // pred_fallthru
        _
      %p1833 = scmp.le.s32.totalorder 2, %s15
      // Predicated region
      $region61: #{tpu_custom_call.1} parent=5 // pred_check
        %p1834 = pneg %p1833
      $region62: #{tpu_custom_call.1} parent=5 // pred_check_branch
        %1836 = sbr.rel (%p1834) target = $region64
      $region63: #{tpu_custom_call.1} parent=5 // pred_region
        %s1837 = ssub.s32 %s15, 2
        // Predicated region
        $region65: #{tpu_custom_call.1} parent=63 // pred_check
          %p1838 = pneg %p212
        $region66: #{tpu_custom_call.1} parent=63 // pred_check_branch
          %1840 = sbr.rel (%p1838) target = $region68
        $region67: #{tpu_custom_call.1} parent=63 // pred_region
          %s1841 = smul.u32 8, %s26
          %p1842 = scmp.lt.s32.totalorder %s1841, 15
          %s1843 = scalar_select %p1842, %s1841, 15
          %s1844 = smul.addr %s1843, 8
          %s1845 = scalar_lea.vmem %s6, %s1844
        $region68: #{tpu_custom_call.1} parent=63 // pred_fallthru
          _
      $region64: #{tpu_custom_call.1} parent=5 // pred_fallthru
        _
    $region6: #{tpu_custom_call.1} parent=1 // loop_footer
      %s19 = sadd.s32 1, %s15
    $region7: #{tpu_custom_call.1} parent=1 // loop_footer_branch
      %14 = sbr.rel target = $region3
    $region8: #{tpu_custom_call.1} parent=1 // loop_exit
      _
    %1846 = vsyncpa [#allocation7], 1
    %s1847 = scalar_lea.sflag [#allocation7], 1
    %1848 = vsyncpa %s1847, 1

</llo_original>
